<compile_context>
chip_gen: v5e
topology: v5e:2x2
jax: 0.10.0
libtpu: 0.0.40
codegen_flags: <defaults>
</compile_context>

<pallas_src>
import functools
import math

import jax
import jax.numpy as jnp
from jax import lax
from jax.experimental import pallas as pl
from jax.experimental.pallas import tpu as pltpu

_LANE = 128


def _attn_kernel(xq_ref, xk_ref, w1_ref, w2_ref, b_ref, o_ref, a_ref=None, *,
                 seq_len, approx_recip):
    # xq_ref: (BB, TQ, H)   query tile            (compute dtype)
    # xk_ref: (BB, Tp, H)   full padded key block (compute dtype)
    # w1_ref: (H, H)  query-side weight, pre-transposed (contracted dim leading)
    # w2_ref: (H, H)  context-side weight, pre-transposed
    # b_ref : (1, H)  bias (f32)
    # o_ref : (BB, TQ, H)   f32 results
    # a_ref : (BB, TQ, Tp)  attention weights (lane-dense padded key axis), optional
    BB, TQ, H = xq_ref.shape
    Tp = xk_ref.shape[1]
    q0 = pl.program_id(1) * TQ

    q_idx = q0 + lax.broadcasted_iota(jnp.int32, (TQ, Tp), 0)
    k_idx = lax.broadcasted_iota(jnp.int32, (TQ, Tp), 1)
    # Valid keys for query q are k < q (strict causal, no self).  For q in {0,1}
    # keep k == 0 valid so the softmax stays finite; those rows are overwritten
    # with the raw input below (the PyTorch `i < 2` branch).  Padded keys
    # (k >= seq_len) are always masked.  The softmax itself runs in f32, so the
    # -1e30 mask constant is safe even on the bf16 compute path.
    valid = (k_idx < jnp.maximum(q_idx, 1)) & (k_idx < seq_len)
    neg_inf = jnp.float32(-1e30)
    copy_row = (q0 + lax.broadcasted_iota(jnp.int32, (TQ, 1), 0)) < 2

    w1 = w1_ref[...]
    w2 = w2_ref[...]
    bias = b_ref[...]

    for bb in range(BB):                      # BB is a small compile-time constant
        xq = xq_ref[bb]                       # (TQ, H)
        xk = xk_ref[bb]                       # (Tp, H)

        # scores[q, k] = xq[q] . xk[k]  (single MXU pass, f32 accumulation)
        scores = lax.dot_general(xq, xk, (((1,), (1,)), ((), ())),
                                 preferred_element_type=jnp.float32)   # (TQ, Tp)
        masked = jnp.where(valid, scores, neg_inf)
        m = jnp.max(masked, axis=-1, keepdims=True)
        p = jnp.exp(masked - m)               # exp(-1e30 - m) underflows to exactly 0
        w = p * pl.reciprocal(jnp.sum(p, axis=-1, keepdims=True),
                              approx=approx_recip)                     # (TQ, Tp)

        # ctx[q] = sum_k w[q, k] * xk[k]
        ctx = jnp.dot(w.astype(xk.dtype), xk,
                      preferred_element_type=jnp.float32)              # (TQ, H)

        # concat-Linear split: cat(xq, ctx) @ W^T = xq @ W1^T + ctx @ W2^T.
        # TODO(synk): when H is a large fraction of the MXU width, fuse these two
        # dots into a single K=2H contraction against the stacked (2H, H) weight.
        proj = (jnp.dot(xq, w1, preferred_element_type=jnp.float32)
                + jnp.dot(ctx.astype(xq.dtype), w2,
                          preferred_element_type=jnp.float32)
                + bias)
        attended = jnp.tanh(proj)

        o_ref[bb] = jnp.where(copy_row, xq.astype(jnp.float32),
                              attended).astype(o_ref.dtype)
        if a_ref is not None:
            a_ref[bb] = w.astype(a_ref.dtype)


def _round_up(x, m):
    return (x + m - 1) // m * m


def _step_vmem_bytes(bb, tq, tp, h, in_size, attn_size, with_attn):
    """Rough per-grid-step VMEM footprint (double-buffered blocks + f32 temps)."""
    xq = bb * tq * h * in_size
    xk = bb * tp * h * in_size
    out = bb * tq * h * 4
    attn = bb * tq * tp * attn_size if with_attn else 0
    consts = 2 * h * h * in_size + h * 4
    temps = 4 * tq * tp * 4                        # scores / masked / p / w (f32)
    return 2 * (xq + xk + out + attn + consts) + temps


def dot_product_concat_attention(inputs_tbh, weight, bias, *,
                                 compute_dtype=jnp.float32,
                                 attn_dtype=jnp.float32,
                                 return_attention=True,
                                 vmem_budget_bytes=40 << 20):
    """inputs_tbh: (T, B, H); weight: (H, 2H) nn.Linear weight; bias: (H,).

    Returns (results (T, B, H) float32, attn (B, T, T) padded causal weights,
    or None when return_attention=False).
    """
    T, B, H = inputs_tbh.shape
    Tp = _round_up(T, _LANE)                       # lane-dense key / attn axis

    x = jnp.transpose(inputs_tbh, (1, 0, 2)).astype(jnp.float32)       # (B, T, H)
    if Tp != T:
        x = jnp.pad(x, ((0, 0), (0, Tp - T), (0, 0)))
    x = x.astype(compute_dtype)

    # Pre-transpose the concat-Linear weight once in XLA so in-kernel
    # contractions are plain x @ W (contracted dim leading on the RHS).
    w1t = jnp.transpose(weight[:, :H]).astype(compute_dtype)           # query part
    w2t = jnp.transpose(weight[:, H:]).astype(compute_dtype)           # context part
    b_row = bias.reshape(1, H).astype(jnp.float32)

    # ---- tile selection (budgeted so it also fits v7x's 64 MiB/TC VMEM) ------
    in_size = jnp.dtype(compute_dtype).itemsize
    attn_size = jnp.dtype(attn_dtype).itemsize
    TQ = _LANE
    for cand in (512, 256, 128):
        if Tp % cand == 0 and _step_vmem_bytes(
                1, cand, Tp, H, in_size, attn_size,
                return_attention) <= vmem_budget_bytes:
            TQ = cand
            break
    BB = 1
    for cand in range(B, 0, -1):
        if B % cand == 0 and _step_vmem_bytes(
                cand, TQ, Tp, H, in_size, attn_size,
                return_attention) <= vmem_budget_bytes:
            BB = cand
            break
    # TODO(synk): for very long sequences (Tp*H beyond the VMEM budget) the key
    # axis would additionally need flash-style tiling with an online softmax.

    grid = (B // BB, Tp // TQ)

    out_shapes = [jax.ShapeDtypeStruct((B, Tp, H), jnp.float32)]
    out_specs = [pl.BlockSpec((BB, TQ, H), lambda b, q: (b, q, 0))]
    if return_attention:
        out_shapes.append(jax.ShapeDtypeStruct((B, Tp, Tp), attn_dtype))
        out_specs.append(pl.BlockSpec((BB, TQ, Tp), lambda b, q: (b, q, 0)))

    outs = pl.pallas_call(
        functools.partial(_attn_kernel, seq_len=T,
                          approx_recip=(compute_dtype != jnp.float32)),
        out_shape=tuple(out_shapes),
        grid_spec=pltpu.PrefetchScalarGridSpec(
            num_scalar_prefetch=0,
            grid=grid,
            in_specs=[
                pl.BlockSpec((BB, TQ, H), lambda b, q: (b, q, 0)),   # query tile
                pl.BlockSpec((BB, Tp, H), lambda b, q: (b, 0, 0)),   # full key block
                pl.BlockSpec((H, H), lambda b, q: (0, 0)),           # grid-invariant
                pl.BlockSpec((H, H), lambda b, q: (0, 0)),           # grid-invariant
                pl.BlockSpec((1, H), lambda b, q: (0, 0)),           # grid-invariant
            ],
            out_specs=out_specs,
        ),
        compiler_params=pltpu.CompilerParams(
            # both axes independent -> shardable across v7x's 2 TensorCores
            dimension_semantics=("parallel", "parallel"),
            vmem_limit_bytes=64 * 1024 * 1024,
        ),
    )(x, x, w1t, w2t, b_row)

    results = jnp.transpose(outs[0][:, :T, :], (1, 0, 2))              # (T, B, H)
    attn_w = outs[1][:, :T, :T] if return_attention else None
    return results, attn_w


def _reference(inputs, weight, bias):
    """Pure-JAX transcription of the PyTorch forward loop (for validation)."""
    T, B, H = inputs.shape
    outs = []
    for i in range(T):
        if i < 2:
            outs.append(inputs[i])
        else:
            hidden = jnp.transpose(inputs[:i], (1, 0, 2))              # (B, i, H)
            q = inputs[i][:, None, :]                                  # (B, 1, H)
            scores = jnp.einsum('bqh,bkh->bqk', q, hidden)             # (B, 1, i)
            w = jax.nn.softmax(scores, axis=-1)[:, 0, :]               # (B, i)
            ctx = jnp.sum(hidden * w[:, :, None], axis=1)              # (B, H)
            cat = jnp.concatenate([inputs[i], ctx], axis=-1)           # (B, 2H)
            outs.append(jnp.tanh(cat @ weight.T + bias))
    return jnp.stack(outs, axis=0)


if __name__ == "__main__":
    T, B, H = 8, 2, 32
    key = jax.random.PRNGKey(0)
    k_x, k_w = jax.random.split(key)

    inputs = jax.random.normal(k_x, (T, B, H), dtype=jnp.float32)

    # nn.Linear(2H, H) with xavier_uniform_(gain=calculate_gain('relu')) + zero bias
    gain = math.sqrt(2.0)
    fan_in, fan_out = 2 * H, H
    bound = gain * math.sqrt(6.0 / (fan_in + fan_out))
    weight = jax.random.uniform(k_w, (H, 2 * H), dtype=jnp.float32,
                                minval=-bound, maxval=bound)
    bias = jnp.zeros((H,), dtype=jnp.float32)

    ref = _reference(inputs, weight, bias)

    # ---- exact f32 path -------------------------------------------------------
    results, attn_w = dot_product_concat_attention(inputs, weight, bias)
    results = jax.block_until_ready(results)
    attn_w = jax.block_until_ready(attn_w)
    assert results.shape == (T, B, H)
    assert attn_w.shape == (B, T, T)
    err = float(jnp.max(jnp.abs(results - ref)))
    assert jnp.allclose(results, ref, atol=1e-5, rtol=1e-5), (
        f"f32 mismatch vs reference: max abs err {err}")

    # ---- bf16 MXU path (v6e/v7x) vs an identically-quantized f32 reference ----
    ref_q = _reference(inputs.astype(jnp.bfloat16).astype(jnp.float32),
                       weight.astype(jnp.bfloat16).astype(jnp.float32), bias)
    results_bf16, _ = dot_product_concat_attention(
        inputs, weight, bias,
        compute_dtype=jnp.bfloat16, attn_dtype=jnp.bfloat16)
    results_bf16 = jax.block_until_ready(results_bf16)
    err16 = float(jnp.max(jnp.abs(results_bf16 - ref_q)))
    assert jnp.allclose(results_bf16, ref_q, atol=3e-2, rtol=3e-2), (
        f"bf16 mismatch vs quantized reference: max abs err {err16}")

    # TODO(synk): PyTorch returns attention_thru_time as a ragged Python list of
    # per-step CPU tensors; here it is a padded (B, T, T) causal weight matrix
    # (rows t<2 are a synthetic one-hot on key 0).
    print("KERNEL_OK")
</pallas_src>

<mosaic_0001>
module attributes {stable_mosaic.version = 11 : i64} {
  func.func @_attn_kernel(%arg0: i32, %arg1: i32, %arg2: memref<2x128x32xf32, #tpu.memory_space<vmem>>, %arg3: memref<2x128x32xf32, #tpu.memory_space<vmem>>, %arg4: memref<32x32xf32, #tpu.memory_space<vmem>>, %arg5: memref<32x32xf32, #tpu.memory_space<vmem>>, %arg6: memref<1x32xf32, #tpu.memory_space<vmem>>, %arg7: memref<2x128x32xf32, #tpu.memory_space<vmem>>, %arg8: memref<2x128x128xf32, #tpu.memory_space<vmem>>) attributes {dimension_semantics = [#tpu.dimension_semantics<parallel>, #tpu.dimension_semantics<parallel>], iteration_bounds = array<i64: 1, 1>, scalar_prefetch = 0 : i64, scratch_operands = 0 : i64, tpu.core_type = #tpu.core_type<tc>, window_params = [{transform_indices = @transform_0, window_bounds = array<i64: 2, 128, 32>}, {transform_indices = @transform_1, window_bounds = array<i64: 2, 128, 32>}, {pipeline_mode = #tpu.pipeline_mode<synchronous>, transform_indices = @transform_2, window_bounds = array<i64: 32, 32>}, {pipeline_mode = #tpu.pipeline_mode<synchronous>, transform_indices = @transform_3, window_bounds = array<i64: 32, 32>}, {pipeline_mode = #tpu.pipeline_mode<synchronous>, transform_indices = @transform_4, window_bounds = array<i64: 1, 32>}, {transform_indices = @transform_5, window_bounds = array<i64: 2, 128, 32>}, {transform_indices = @transform_6, window_bounds = array<i64: 2, 128, 128>}]} {
    %c128_i32 = arith.constant 128 : i32
    %0 = arith.muli %arg1, %c128_i32 : i32
    %1 = tpu.iota {dimensions = array<i32: 0>} : vector<128x128xi32>
    %2 = vector.broadcast %0 : i32 to vector<128x128xi32>
    %3 = arith.addi %2, %1 : vector<128x128xi32>
    %4 = tpu.iota {dimensions = array<i32: 1>} : vector<128x128xi32>
    %c1_i32 = arith.constant 1 : i32
    %5 = vector.broadcast %c1_i32 : i32 to vector<128x128xi32>
    %6 = arith.maxsi %3, %5 : vector<128x128xi32>
    %7 = arith.cmpi slt, %4, %6 : vector<128x128xi32>
    %c8_i32 = arith.constant 8 : i32
    %8 = vector.broadcast %c8_i32 : i32 to vector<128x128xi32>
    %9 = arith.cmpi slt, %4, %8 : vector<128x128xi32>
    %10 = arith.andi %7, %9 : vector<128x128xi1>
    %11 = tpu.iota {dimensions = array<i32: 0>} : vector<128x1xi32>
    %12 = vector.broadcast %0 : i32 to vector<128x1xi32>
    %13 = arith.addi %12, %11 : vector<128x1xi32>
    %c2_i32 = arith.constant 2 : i32
    %14 = vector.broadcast %c2_i32 : i32 to vector<128x1xi32>
    %15 = arith.cmpi slt, %13, %14 : vector<128x1xi32>
    %c0 = arith.constant 0 : index
    %c0_0 = arith.constant 0 : index
    %16 = vector.load %arg4[%c0, %c0_0] : memref<32x32xf32, #tpu.memory_space<vmem>>, vector<32x32xf32>
    %c0_1 = arith.constant 0 : index
    %c0_2 = arith.constant 0 : index
    %17 = vector.load %arg5[%c0_1, %c0_2] : memref<32x32xf32, #tpu.memory_space<vmem>>, vector<32x32xf32>
    %c0_3 = arith.constant 0 : index
    %c0_4 = arith.constant 0 : index
    %18 = vector.load %arg6[%c0_3, %c0_4] : memref<1x32xf32, #tpu.memory_space<vmem>>, vector<1x32xf32>
    %c0_5 = arith.constant 0 : index
    %c0_6 = arith.constant 0 : index
    %c0_7 = arith.constant 0 : index
    %19 = vector.load %arg2[%c0_5, %c0_6, %c0_7] : memref<2x128x32xf32, #tpu.memory_space<vmem>>, vector<1x128x32xf32>
    %20 = vector.shape_cast %19 : vector<1x128x32xf32> to vector<128x32xf32>
    %c0_8 = arith.constant 0 : index
    %c0_9 = arith.constant 0 : index
    %c0_10 = arith.constant 0 : index
    %21 = vector.load %arg3[%c0_8, %c0_9, %c0_10] : memref<2x128x32xf32, #tpu.memory_space<vmem>>, vector<1x128x32xf32>
    %22 = vector.shape_cast %21 : vector<1x128x32xf32> to vector<128x32xf32>
    %cst = arith.constant dense<0.000000e+00> : vector<128x128xf32>
    %23 = tpu.matmul %20, %22, %cst {dimension_numbers = #tpu.dot_dimension_numbers<[1], [1], [0], [0], [0, 0, 1, 0], [], []>} : vector<128x32xf32>, vector<128x32xf32>, vector<128x128xf32> -> vector<128x128xf32>
    %cst_11 = arith.constant -1.000000e+30 : f32
    %24 = vector.broadcast %cst_11 : f32 to vector<128x128xf32>
    %25 = arith.select %10, %23, %24 : vector<128x128xi1>, vector<128x128xf32>
    %cst_12 = arith.constant dense<0xFF800000> : vector<128xf32>
    %26 = vector.multi_reduction <maximumf>, %25, %cst_12 [1] : vector<128x128xf32> to vector<128xf32>
    %27 = vector.shape_cast %26 : vector<128xf32> to vector<128x1xf32>
    %28 = vector.broadcast %27 : vector<128x1xf32> to vector<128x128xf32>
    %29 = arith.subf %25, %28 : vector<128x128xf32>
    %30 = math.exp %29 : vector<128x128xf32>
    %cst_13 = arith.constant dense<0.000000e+00> : vector<128xf32>
    %31 = vector.multi_reduction <add>, %30, %cst_13 [1] : vector<128x128xf32> to vector<128xf32>
    %32 = vector.shape_cast %31 : vector<128xf32> to vector<128x1xf32>
    %33 = tpu.reciprocal %32 : vector<128x1xf32> -> vector<128x1xf32>
    %34 = vector.broadcast %33 : vector<128x1xf32> to vector<128x128xf32>
    %35 = arith.mulf %30, %34 : vector<128x128xf32>
    %cst_14 = arith.constant dense<0.000000e+00> : vector<128x32xf32>
    %36 = tpu.matmul %35, %22, %cst_14 {dimension_numbers = #tpu.dot_dimension_numbers<[1], [0], [0], [1], [0, 0, 1, 1], [], []>} : vector<128x128xf32>, vector<128x32xf32>, vector<128x32xf32> -> vector<128x32xf32>
    %cst_15 = arith.constant dense<0.000000e+00> : vector<128x32xf32>
    %37 = tpu.matmul %20, %16, %cst_15 {dimension_numbers = #tpu.dot_dimension_numbers<[1], [0], [0], [1], [0, 0, 1, 1], [], []>} : vector<128x32xf32>, vector<32x32xf32>, vector<128x32xf32> -> vector<128x32xf32>
    %cst_16 = arith.constant dense<0.000000e+00> : vector<128x32xf32>
    %38 = tpu.matmul %36, %17, %cst_16 {dimension_numbers = #tpu.dot_dimension_numbers<[1], [0], [0], [1], [0, 0, 1, 1], [], []>} : vector<128x32xf32>, vector<32x32xf32>, vector<128x32xf32> -> vector<128x32xf32>
    %39 = arith.addf %37, %38 : vector<128x32xf32>
    %40 = vector.broadcast %18 : vector<1x32xf32> to vector<128x32xf32>
    %41 = arith.addf %39, %40 : vector<128x32xf32>
    %42 = math.tanh %41 : vector<128x32xf32>
    %43 = vector.shape_cast %15 : vector<128x1xi1> to vector<128x1xi1>
    %44 = vector.broadcast %43 : vector<128x1xi1> to vector<128x32xi1>
    %45 = arith.select %44, %20, %42 : vector<128x32xi1>, vector<128x32xf32>
    %c0_17 = arith.constant 0 : index
    %c0_18 = arith.constant 0 : index
    %c0_19 = arith.constant 0 : index
    %46 = vector.load %arg7[%c0_17, %c0_18, %c0_19] : memref<2x128x32xf32, #tpu.memory_space<vmem>>, vector<1x128x32xf32>
    %47 = vector.shape_cast %46 : vector<1x128x32xf32> to vector<128x32xf32>
    %48 = vector.shape_cast %45 : vector<128x32xf32> to vector<1x128x32xf32>
    tpu.vector_store %arg7[%c0_17, %c0_18, %c0_19], %48 {strides = array<i32>} : memref<2x128x32xf32, #tpu.memory_space<vmem>>, vector<1x128x32xf32>,
    %c0_20 = arith.constant 0 : index
    %c0_21 = arith.constant 0 : index
    %c0_22 = arith.constant 0 : index
    %49 = vector.load %arg8[%c0_20, %c0_21, %c0_22] : memref<2x128x128xf32, #tpu.memory_space<vmem>>, vector<1x128x128xf32>
    %50 = vector.shape_cast %49 : vector<1x128x128xf32> to vector<128x128xf32>
    %51 = vector.shape_cast %35 : vector<128x128xf32> to vector<1x128x128xf32>
    tpu.vector_store %arg8[%c0_20, %c0_21, %c0_22], %51 {strides = array<i32>} : memref<2x128x128xf32, #tpu.memory_space<vmem>>, vector<1x128x128xf32>,
    %c1 = arith.constant 1 : index
    %c0_23 = arith.constant 0 : index
    %c0_24 = arith.constant 0 : index
    %52 = vector.load %arg2[%c1, %c0_23, %c0_24] : memref<2x128x32xf32, #tpu.memory_space<vmem>>, vector<1x128x32xf32>
    %53 = vector.shape_cast %52 : vector<1x128x32xf32> to vector<128x32xf32>
    %c1_25 = arith.constant 1 : index
    %c0_26 = arith.constant 0 : index
    %c0_27 = arith.constant 0 : index
    %54 = vector.load %arg3[%c1_25, %c0_26, %c0_27] : memref<2x128x32xf32, #tpu.memory_space<vmem>>, vector<1x128x32xf32>
    %55 = vector.shape_cast %54 : vector<1x128x32xf32> to vector<128x32xf32>
    %cst_28 = arith.constant dense<0.000000e+00> : vector<128x128xf32>
    %56 = tpu.matmul %53, %55, %cst_28 {dimension_numbers = #tpu.dot_dimension_numbers<[1], [1], [0], [0], [0, 0, 1, 0], [], []>} : vector<128x32xf32>, vector<128x32xf32>, vector<128x128xf32> -> vector<128x128xf32>
    %cst_29 = arith.constant -1.000000e+30 : f32
    %57 = vector.broadcast %cst_29 : f32 to vector<128x128xf32>
    %58 = arith.select %10, %56, %57 : vector<128x128xi1>, vector<128x128xf32>
    %cst_30 = arith.constant dense<0xFF800000> : vector<128xf32>
    %59 = vector.multi_reduction <maximumf>, %58, %cst_30 [1] : vector<128x128xf32> to vector<128xf32>
    %60 = vector.shape_cast %59 : vector<128xf32> to vector<128x1xf32>
    %61 = vector.broadcast %60 : vector<128x1xf32> to vector<128x128xf32>
    %62 = arith.subf %58, %61 : vector<128x128xf32>
    %63 = math.exp %62 : vector<128x128xf32>
    %cst_31 = arith.constant dense<0.000000e+00> : vector<128xf32>
    %64 = vector.multi_reduction <add>, %63, %cst_31 [1] : vector<128x128xf32> to vector<128xf32>
    %65 = vector.shape_cast %64 : vector<128xf32> to vector<128x1xf32>
    %66 = tpu.reciprocal %65 : vector<128x1xf32> -> vector<128x1xf32>
    %67 = vector.broadcast %66 : vector<128x1xf32> to vector<128x128xf32>
    %68 = arith.mulf %63, %67 : vector<128x128xf32>
    %cst_32 = arith.constant dense<0.000000e+00> : vector<128x32xf32>
    %69 = tpu.matmul %68, %55, %cst_32 {dimension_numbers = #tpu.dot_dimension_numbers<[1], [0], [0], [1], [0, 0, 1, 1], [], []>} : vector<128x128xf32>, vector<128x32xf32>, vector<128x32xf32> -> vector<128x32xf32>
    %cst_33 = arith.constant dense<0.000000e+00> : vector<128x32xf32>
    %70 = tpu.matmul %53, %16, %cst_33 {dimension_numbers = #tpu.dot_dimension_numbers<[1], [0], [0], [1], [0, 0, 1, 1], [], []>} : vector<128x32xf32>, vector<32x32xf32>, vector<128x32xf32> -> vector<128x32xf32>
    %cst_34 = arith.constant dense<0.000000e+00> : vector<128x32xf32>
    %71 = tpu.matmul %69, %17, %cst_34 {dimension_numbers = #tpu.dot_dimension_numbers<[1], [0], [0], [1], [0, 0, 1, 1], [], []>} : vector<128x32xf32>, vector<32x32xf32>, vector<128x32xf32> -> vector<128x32xf32>
    %72 = arith.addf %70, %71 : vector<128x32xf32>
    %73 = vector.broadcast %18 : vector<1x32xf32> to vector<128x32xf32>
    %74 = arith.addf %72, %73 : vector<128x32xf32>
    %75 = math.tanh %74 : vector<128x32xf32>
    %76 = vector.shape_cast %15 : vector<128x1xi1> to vector<128x1xi1>
    %77 = vector.broadcast %76 : vector<128x1xi1> to vector<128x32xi1>
    %78 = arith.select %77, %53, %75 : vector<128x32xi1>, vector<128x32xf32>
    %c1_35 = arith.constant 1 : index
    %c0_36 = arith.constant 0 : index
    %c0_37 = arith.constant 0 : index
    %79 = vector.load %arg7[%c1_35, %c0_36, %c0_37] : memref<2x128x32xf32, #tpu.memory_space<vmem>>, vector<1x128x32xf32>
    %80 = vector.shape_cast %79 : vector<1x128x32xf32> to vector<128x32xf32>
    %81 = vector.shape_cast %78 : vector<128x32xf32> to vector<1x128x32xf32>
    tpu.vector_store %arg7[%c1_35, %c0_36, %c0_37], %81 {strides = array<i32>} : memref<2x128x32xf32, #tpu.memory_space<vmem>>, vector<1x128x32xf32>,
    %c1_38 = arith.constant 1 : index
    %c0_39 = arith.constant 0 : index
    %c0_40 = arith.constant 0 : index
    %82 = vector.load %arg8[%c1_38, %c0_39, %c0_40] : memref<2x128x128xf32, #tpu.memory_space<vmem>>, vector<1x128x128xf32>
    %83 = vector.shape_cast %82 : vector<1x128x128xf32> to vector<128x128xf32>
    %84 = vector.shape_cast %68 : vector<128x128xf32> to vector<1x128x128xf32>
    tpu.vector_store %arg8[%c1_38, %c0_39, %c0_40], %84 {strides = array<i32>} : memref<2x128x128xf32, #tpu.memory_space<vmem>>, vector<1x128x128xf32>,
    return
  }
  func.func @transform_0(%arg0: i32, %arg1: i32) -> (i32, i32, i32) {
    %c0_i32 = arith.constant 0 : i32
    %c0_i32_0 = arith.constant 0 : i32
    return %arg0, %arg1, %c0_i32 : i32, i32, i32
  }
  func.func @transform_1(%arg0: i32, %arg1: i32) -> (i32, i32, i32) {
    %c0_i32 = arith.constant 0 : i32
    %c0_i32_0 = arith.constant 0 : i32
    %c0_i32_1 = arith.constant 0 : i32
    return %arg0, %c0_i32, %c0_i32_0 : i32, i32, i32
  }
  func.func @transform_2(%arg0: i32, %arg1: i32) -> (i32, i32) {
    %c0_i32 = arith.constant 0 : i32
    %c0_i32_0 = arith.constant 0 : i32
    %c0_i32_1 = arith.constant 0 : i32
    return %c0_i32, %c0_i32_0 : i32, i32
  }
  func.func @transform_3(%arg0: i32, %arg1: i32) -> (i32, i32) {
    %c0_i32 = arith.constant 0 : i32
    %c0_i32_0 = arith.constant 0 : i32
    %c0_i32_1 = arith.constant 0 : i32
    return %c0_i32, %c0_i32_0 : i32, i32
  }
  func.func @transform_4(%arg0: i32, %arg1: i32) -> (i32, i32) {
    %c0_i32 = arith.constant 0 : i32
    %c0_i32_0 = arith.constant 0 : i32
    %c0_i32_1 = arith.constant 0 : i32
    return %c0_i32, %c0_i32_0 : i32, i32
  }
  func.func @transform_5(%arg0: i32, %arg1: i32) -> (i32, i32, i32) {
    %c0_i32 = arith.constant 0 : i32
    %c0_i32_0 = arith.constant 0 : i32
    return %arg0, %arg1, %c0_i32 : i32, i32, i32
  }
  func.func @transform_6(%arg0: i32, %arg1: i32) -> (i32, i32, i32) {
    %c0_i32 = arith.constant 0 : i32
    %c0_i32_0 = arith.constant 0 : i32
    return %arg0, %arg1, %c0_i32 : i32, i32, i32
  }
}

</mosaic_0001>

<llo_original>
// kernel: tpu_custom_call.1
$region0: #{tpu_custom_call.1}
  #allocation0 [shape = 'u32[]', space=smem, size = 0x4, offset = 0x4, fixed_abs, tag = 'smem constant byte address 0x4 - core index']
  #allocation1 [shape = 'u32[72,128]{1,0:T(1,128)}', space=vmem, size = 0x9000, scoped, tag = 'internal scratch']
  %s0 = inlined_call_operand.vmem [shape: f32[2,128,32], index: 0, kind: input, shape index: {}]
  %s1 = inlined_call_operand.vmem [shape: f32[2,128,32], index: 1, kind: input, shape index: {}]
  %s2 = inlined_call_operand.vmem [shape: f32[32,32], index: 2, kind: input, shape index: {}]
  %s3 = inlined_call_operand.vmem [shape: f32[32,32], index: 3, kind: input, shape index: {}]
  %s4 = inlined_call_operand.vmem [shape: f32[1,32], index: 4, kind: input, shape index: {}]
  %s5 = inlined_call_operand.vmem [shape: f32[2,128,32], index: 5, kind: output, shape index: {0}]
  %s6 = inlined_call_operand.hbm [shape: f32[2,128,128], index: 6, kind: output, shape index: {1}]
  %7 = xla_tuple %s5, %s6
  %s8 = sld [smem:[#allocation0]]
  $region38: #{tpu_custom_call.1} parent=0
    _
  %s10 = ssub.s32 1, %s8
  %s11 = scalar_select 0, %s10, %s8
  $region1: #{tpu_custom_call.1} parent=0
    #allocation2 [shape = 'u8[131072]{0}', space=vmem, size = 0x20000, scoped, tag = 'output window, operand 1, single buffered']
    #allocation3 [shape = 's32[1]{0}', space=sflag, size = 0x4, scoped, tag = 'scoped memory for tpu_custom_call.1']
    %12 = vsyncpa [#allocation3], 0
    // Predicated region
    $region2: #{tpu_custom_call.1} parent=1 // pred_check
      _
    $region3: #{tpu_custom_call.1} parent=1 // pred_check_branch
      %14 = sbr.rel (0) target = $region5
    $region4: #{tpu_custom_call.1} parent=1 // pred_region
      _
    $region5: #{tpu_custom_call.1} parent=1 // pred_fallthru
      _
    // Predicated region
    $region6: #{tpu_custom_call.1} parent=1 // pred_check
      _
    $region7: #{tpu_custom_call.1} parent=1 // pred_check_branch
      %16 = sbr.rel (0) target = $region9
    $region8: #{tpu_custom_call.1} parent=1 // pred_region
      _
    $region9: #{tpu_custom_call.1} parent=1 // pred_fallthru
      _
    // Predicated region
    $region10: #{tpu_custom_call.1} parent=1 // pred_check
      _
    $region11: #{tpu_custom_call.1} parent=1 // pred_check_branch
      %18 = sbr.rel (0) target = $region13
    $region12: #{tpu_custom_call.1} parent=1 // pred_region
      _
    $region13: #{tpu_custom_call.1} parent=1 // pred_fallthru
      _
    // Predicated region
    $region14: #{tpu_custom_call.1} parent=1 // pred_check
      _
    $region15: #{tpu_custom_call.1} parent=1 // pred_check_branch
      %20 = sbr.rel (0) target = $region17
    $region16: #{tpu_custom_call.1} parent=1 // pred_region
      _
    $region17: #{tpu_custom_call.1} parent=1 // pred_fallthru
      _
    // Predicated region
    $region18: #{tpu_custom_call.1} parent=1 // pred_check
      _
    $region19: #{tpu_custom_call.1} parent=1 // pred_check_branch
      %22 = sbr.rel (0) target = $region21
    $region20: #{tpu_custom_call.1} parent=1 // pred_region
      _
    $region21: #{tpu_custom_call.1} parent=1 // pred_fallthru
      _
    %s23 = smul.u32 0, 128
    %v24 = vlaneseq
    %v25 = vshrl.u32 %v24, 7
    %v26 = vadd.s32 %v25, 8
    %v27 = vadd.s32 %v25, 16
    %v28 = vadd.s32 %v25, 24
    %v29 = vadd.s32 %v25, 32
    %v30 = vadd.s32 %v25, 40
    %v31 = vadd.s32 %v25, 48
    %v32 = vadd.s32 %v25, 56
    %v33 = vadd.s32 %v25, 64
    %v34 = vadd.s32 %v25, 72
    %v35 = vadd.s32 %v25, 80
    %v36 = vadd.s32 %v25, 88
    %v37 = vadd.s32 %v25, 96
    %v38 = vadd.s32 %v25, 104
    %v39 = vadd.s32 %v25, 112
    %v40 = vadd.s32 %v25, 120
    %v41 = vstv %s23
    %v42 = vadd.s32 %v41, %v25
    %v43 = vadd.s32 %v41, %v26
    %v44 = vadd.s32 %v41, %v27
    %v45 = vadd.s32 %v41, %v28
    %v46 = vadd.s32 %v41, %v29
    %v47 = vadd.s32 %v41, %v30
    %v48 = vadd.s32 %v41, %v31
    %v49 = vadd.s32 %v41, %v32
    %v50 = vadd.s32 %v41, %v33
    %v51 = vadd.s32 %v41, %v34
    %v52 = vadd.s32 %v41, %v35
    %v53 = vadd.s32 %v41, %v36
    %v54 = vadd.s32 %v41, %v37
    %v55 = vadd.s32 %v41, %v38
    %v56 = vadd.s32 %v41, %v39
    %v57 = vadd.s32 %v41, %v40
    %v58 = vlaneseq
    %v59 = vand.u32 %v58, 127
    %vm60 = vcmp.gt.s32.totalorder %v42, 1
    %v61 = vsel %vm60, %v42, 1
    %vm62 = vcmp.gt.s32.totalorder %v43, 1
    %v63 = vsel %vm62, %v43, 1
    %vm64 = vcmp.gt.s32.totalorder %v44, 1
    %v65 = vsel %vm64, %v44, 1
    %vm66 = vcmp.gt.s32.totalorder %v45, 1
    %v67 = vsel %vm66, %v45, 1
    %vm68 = vcmp.gt.s32.totalorder %v46, 1
    %v69 = vsel %vm68, %v46, 1
    %vm70 = vcmp.gt.s32.totalorder %v47, 1
    %v71 = vsel %vm70, %v47, 1
    %vm72 = vcmp.gt.s32.totalorder %v48, 1
    %v73 = vsel %vm72, %v48, 1
    %vm74 = vcmp.gt.s32.totalorder %v49, 1
    %v75 = vsel %vm74, %v49, 1
    %vm76 = vcmp.gt.s32.totalorder %v50, 1
    %v77 = vsel %vm76, %v50, 1
    %vm78 = vcmp.gt.s32.totalorder %v51, 1
    %v79 = vsel %vm78, %v51, 1
    %vm80 = vcmp.gt.s32.totalorder %v52, 1
    %v81 = vsel %vm80, %v52, 1
    %vm82 = vcmp.gt.s32.totalorder %v53, 1
    %v83 = vsel %vm82, %v53, 1
    %vm84 = vcmp.gt.s32.totalorder %v54, 1
    %v85 = vsel %vm84, %v54, 1
    %vm86 = vcmp.gt.s32.totalorder %v55, 1
    %v87 = vsel %vm86, %v55, 1
    %vm88 = vcmp.gt.s32.totalorder %v56, 1
    %v89 = vsel %vm88, %v56, 1
    %vm90 = vcmp.gt.s32.totalorder %v57, 1
    %v91 = vsel %vm90, %v57, 1
    %vm92 = vcmp.lt.s32.totalorder %v59, %v61
    %vm93 = vcmp.lt.s32.totalorder %v59, %v63
    %vm94 = vcmp.lt.s32.totalorder %v59, %v65
    %vm95 = vcmp.lt.s32.totalorder %v59, %v67
    %vm96 = vcmp.lt.s32.totalorder %v59, %v69
    %vm97 = vcmp.lt.s32.totalorder %v59, %v71
    %vm98 = vcmp.lt.s32.totalorder %v59, %v73
    %vm99 = vcmp.lt.s32.totalorder %v59, %v75
    %vm100 = vcmp.lt.s32.totalorder %v59, %v77
    %vm101 = vcmp.lt.s32.totalorder %v59, %v79
    %vm102 = vcmp.lt.s32.totalorder %v59, %v81
    %vm103 = vcmp.lt.s32.totalorder %v59, %v83
    %vm104 = vcmp.lt.s32.totalorder %v59, %v85
    %vm105 = vcmp.lt.s32.totalorder %v59, %v87
    %vm106 = vcmp.lt.s32.totalorder %v59, %v89
    %vm107 = vcmp.lt.s32.totalorder %v59, %v91
    %vm108 = vcmp.lt.s32.totalorder %v59, 8
    %vm109 = vmand %vm92, %vm108
    %vm110 = vmand %vm93, %vm108
    %vm111 = vmand %vm94, %vm108
    %vm112 = vmand %vm95, %vm108
    %vm113 = vmand %vm96, %vm108
    %vm114 = vmand %vm97, %vm108
    %vm115 = vmand %vm98, %vm108
    %vm116 = vmand %vm99, %vm108
    %vm117 = vmand %vm100, %vm108
    %vm118 = vmand %vm101, %vm108
    %vm119 = vmand %vm102, %vm108
    %vm120 = vmand %vm103, %vm108
    %vm121 = vmand %vm104, %vm108
    %vm122 = vmand %vm105, %vm108
    %vm123 = vmand %vm106, %vm108
    %vm124 = vmand %vm107, %vm108
    %vm125 = vcmp.lt.s32.totalorder %v42, 2
    %vm126 = vcmp.lt.s32.totalorder %v43, 2
    %vm127 = vcmp.lt.s32.totalorder %v44, 2
    %vm128 = vcmp.lt.s32.totalorder %v45, 2
    %vm129 = vcmp.lt.s32.totalorder %v46, 2
    %vm130 = vcmp.lt.s32.totalorder %v47, 2
    %vm131 = vcmp.lt.s32.totalorder %v48, 2
    %vm132 = vcmp.lt.s32.totalorder %v49, 2
    %vm133 = vcmp.lt.s32.totalorder %v50, 2
    %vm134 = vcmp.lt.s32.totalorder %v51, 2
    %vm135 = vcmp.lt.s32.totalorder %v52, 2
    %vm136 = vcmp.lt.s32.totalorder %v53, 2
    %vm137 = vcmp.lt.s32.totalorder %v54, 2
    %vm138 = vcmp.lt.s32.totalorder %v55, 2
    %vm139 = vcmp.lt.s32.totalorder %v56, 2
    %vm140 = vcmp.lt.s32.totalorder %v57, 2
    %v141 = vld [vmem:[%s2] sm:$0xff]
    %v142 = vld [vmem:[%s2 + $0x8] sm:$0xff]
    %v143 = vld [vmem:[%s2 + $0x10] sm:$0xff]
    %v144 = vld [vmem:[%s2 + $0x18] sm:$0xff]
    %v145 = vld [vmem:[%s3] sm:$0xff]
    %v146 = vld [vmem:[%s3 + $0x8] sm:$0xff]
    %v147 = vld [vmem:[%s3 + $0x10] sm:$0xff]
    %v148 = vld [vmem:[%s3 + $0x18] sm:$0xff]
    %v149 = vld [vmem:[%s4] sm:$0x1]
    %v150 = vld [vmem:[%s0] sm:$0xff]
    %v151 = vld [vmem:[%s0 + $0x8] sm:$0xff]
    %v152 = vld [vmem:[%s0 + $0x10] sm:$0xff]
    %v153 = vld [vmem:[%s0 + $0x18] sm:$0xff]
    %v154 = vld [vmem:[%s0 + $0x20] sm:$0xff]
    %v155 = vld [vmem:[%s0 + $0x28] sm:$0xff]
    %v156 = vld [vmem:[%s0 + $0x30] sm:$0xff]
    %v157 = vld [vmem:[%s0 + $0x38] sm:$0xff]
    %v158 = vld [vmem:[%s0 + $0x40] sm:$0xff]
    %v159 = vld [vmem:[%s0 + $0x48] sm:$0xff]
    %v160 = vld [vmem:[%s0 + $0x50] sm:$0xff]
    %v161 = vld [vmem:[%s0 + $0x58] sm:$0xff]
    %v162 = vld [vmem:[%s0 + $0x60] sm:$0xff]
    %v163 = vld [vmem:[%s0 + $0x68] sm:$0xff]
    %v164 = vld [vmem:[%s0 + $0x70] sm:$0xff]
    %v165 = vld [vmem:[%s0 + $0x78] sm:$0xff]
    %v166 = vld [vmem:[%s1] sm:$0xff]
    %v167 = vld [vmem:[%s1 + $0x8] sm:$0xff]
    %v168 = vld [vmem:[%s1 + $0x10] sm:$0xff]
    %v169 = vld [vmem:[%s1 + $0x18] sm:$0xff]
    %v170 = vld [vmem:[%s1 + $0x20] sm:$0xff]
    %v171 = vld [vmem:[%s1 + $0x28] sm:$0xff]
    %v172 = vld [vmem:[%s1 + $0x30] sm:$0xff]
    %v173 = vld [vmem:[%s1 + $0x38] sm:$0xff]
    %v174 = vld [vmem:[%s1 + $0x40] sm:$0xff]
    %v175 = vld [vmem:[%s1 + $0x48] sm:$0xff]
    %v176 = vld [vmem:[%s1 + $0x50] sm:$0xff]
    %v177 = vld [vmem:[%s1 + $0x58] sm:$0xff]
    %v178 = vld [vmem:[%s1 + $0x60] sm:$0xff]
    %v179 = vld [vmem:[%s1 + $0x68] sm:$0xff]
    %v180 = vld [vmem:[%s1 + $0x70] sm:$0xff]
    %v181 = vld [vmem:[%s1 + $0x78] sm:$0xff]
    %vm182 = vcmask 261120
    %v184 = vsel %vm182, %v150, 0
    %v187 = vsel %vm182, %v151, 0
    %v190 = vsel %vm182, %v152, 0
    %v193 = vsel %vm182, %v153, 0
    %v196 = vsel %vm182, %v154, 0
    %v199 = vsel %vm182, %v155, 0
    %v202 = vsel %vm182, %v156, 0
    %v205 = vsel %vm182, %v157, 0
    %v208 = vsel %vm182, %v158, 0
    %v211 = vsel %vm182, %v159, 0
    %v214 = vsel %vm182, %v160, 0
    %v217 = vsel %vm182, %v161, 0
    %v220 = vsel %vm182, %v162, 0
    %v223 = vsel %vm182, %v163, 0
    %v226 = vsel %vm182, %v164, 0
    %v229 = vsel %vm182, %v165, 0
    %v232 = vsel %vm182, %v166, 0
    %v235 = vsel %vm182, %v167, 0
    %v238 = vsel %vm182, %v168, 0
    %v241 = vsel %vm182, %v169, 0
    %v244 = vsel %vm182, %v170, 0
    %v247 = vsel %vm182, %v171, 0
    %v250 = vsel %vm182, %v172, 0
    %v253 = vsel %vm182, %v173, 0
    %v256 = vsel %vm182, %v174, 0
    %v259 = vsel %vm182, %v175, 0
    %v262 = vsel %vm182, %v176, 0
    %v265 = vsel %vm182, %v177, 0
    %v268 = vsel %vm182, %v178, 0
    %v271 = vsel %vm182, %v179, 0
    %v274 = vsel %vm182, %v180, 0
    %v277 = vsel %vm182, %v181, 0
    %279 = vmatpush.xpose.msra.mxu0 %v277
    %280 = vmatpush.xpose.msra.mxu0 %v274
    %281 = vmatpush.xpose.msra.mxu0 %v271
    %282 = vmatpush.xpose.msra.mxu0 %v268
    %283 = vmatpush.xpose.msra.mxu0 %v265
    %284 = vmatpush.xpose.msra.mxu0 %v262
    %285 = vmatpush.xpose.msra.mxu0 %v259
    %286 = vmatpush.xpose.msra.mxu0 %v256
    %287 = vmatpush.xpose.msra.mxu0 %v253
    %288 = vmatpush.xpose.msra.mxu0 %v250
    %289 = vmatpush.xpose.msra.mxu0 %v247
    %290 = vmatpush.xpose.msra.mxu0 %v244
    %291 = vmatpush.xpose.msra.mxu0 %v241
    %292 = vmatpush.xpose.msra.mxu0 %v238
    %293 = vmatpush.xpose.msra.mxu0 %v235
    %294 = vmatpush.xpose.msra.mxu0 %v232
    %295 = vmatmul.f32.gmra.mxu0 %v184
    %v296 = vpop.f32.mrf.mxu0
    %v297 = vadd.f32 0.0, %v296
    %298 = vmatmul.f32.gmra.mxu0 %v187
    %v299 = vpop.f32.mrf.mxu0
    %v300 = vadd.f32 0.0, %v299
    %301 = vmatmul.f32.gmra.mxu0 %v190
    %v302 = vpop.f32.mrf.mxu0
    %v303 = vadd.f32 0.0, %v302
    %304 = vmatmul.f32.gmra.mxu0 %v193
    %v305 = vpop.f32.mrf.mxu0
    %v306 = vadd.f32 0.0, %v305
    %307 = vmatmul.f32.gmra.mxu0 %v196
    %v308 = vpop.f32.mrf.mxu0
    %v309 = vadd.f32 0.0, %v308
    %310 = vmatmul.f32.gmra.mxu0 %v199
    %v311 = vpop.f32.mrf.mxu0
    %v312 = vadd.f32 0.0, %v311
    %313 = vmatmul.f32.gmra.mxu0 %v202
    %v314 = vpop.f32.mrf.mxu0
    %v315 = vadd.f32 0.0, %v314
    %316 = vmatmul.f32.gmra.mxu0 %v205
    %v317 = vpop.f32.mrf.mxu0
    %v318 = vadd.f32 0.0, %v317
    %319 = vmatmul.f32.gmra.mxu0 %v208
    %v320 = vpop.f32.mrf.mxu0
    %v321 = vadd.f32 0.0, %v320
    %322 = vmatmul.f32.gmra.mxu0 %v211
    %v323 = vpop.f32.mrf.mxu0
    %v324 = vadd.f32 0.0, %v323
    %325 = vmatmul.f32.gmra.mxu0 %v214
    %v326 = vpop.f32.mrf.mxu0
    %v327 = vadd.f32 0.0, %v326
    %328 = vmatmul.f32.gmra.mxu0 %v217
    %v329 = vpop.f32.mrf.mxu0
    %v330 = vadd.f32 0.0, %v329
    %331 = vmatmul.f32.gmra.mxu0 %v220
    %v332 = vpop.f32.mrf.mxu0
    %v333 = vadd.f32 0.0, %v332
    %334 = vmatmul.f32.gmra.mxu0 %v223
    %v335 = vpop.f32.mrf.mxu0
    %v336 = vadd.f32 0.0, %v335
    %337 = vmatmul.f32.gmra.mxu0 %v226
    %v338 = vpop.f32.mrf.mxu0
    %v339 = vadd.f32 0.0, %v338
    %340 = vmatmul.f32.gmra.mxu0 %v229
    %v341 = vpop.f32.mrf.mxu0
    %v342 = vadd.f32 0.0, %v341
    %343 = vdwg.mxu0
    %v344 = vsel %vm109, %v297, -1e+30
    %v345 = vsel %vm110, %v300, -1e+30
    %v346 = vsel %vm111, %v303, -1e+30
    %v347 = vsel %vm112, %v306, -1e+30
    %v348 = vsel %vm113, %v309, -1e+30
    %v349 = vsel %vm114, %v312, -1e+30
    %v350 = vsel %vm115, %v315, -1e+30
    %v351 = vsel %vm116, %v318, -1e+30
    %v352 = vsel %vm117, %v321, -1e+30
    %v353 = vsel %vm118, %v324, -1e+30
    %v354 = vsel %vm119, %v327, -1e+30
    %v355 = vsel %vm120, %v330, -1e+30
    %v356 = vsel %vm121, %v333, -1e+30
    %v357 = vsel %vm122, %v336, -1e+30
    %v358 = vsel %vm123, %v339, -1e+30
    %v359 = vsel %vm124, %v342, -1e+30
    %360 = vmax.xlane.f32.xlu0 %v344
    %v361 = vpop.xlane.xlu0 %360
    %362 = vmax.xlane.f32.xlu0 %v345
    %v363 = vpop.xlane.xlu0 %362
    %364 = vmax.xlane.f32.xlu0 %v346
    %v365 = vpop.xlane.xlu0 %364
    %366 = vmax.xlane.f32.xlu0 %v347
    %v367 = vpop.xlane.xlu0 %366
    %368 = vmax.xlane.f32.xlu0 %v348
    %v369 = vpop.xlane.xlu0 %368
    %370 = vmax.xlane.f32.xlu0 %v349
    %v371 = vpop.xlane.xlu0 %370
    %372 = vmax.xlane.f32.xlu0 %v350
    %v373 = vpop.xlane.xlu0 %372
    %374 = vmax.xlane.f32.xlu0 %v351
    %v375 = vpop.xlane.xlu0 %374
    %376 = vmax.xlane.f32.xlu0 %v352
    %v377 = vpop.xlane.xlu0 %376
    %378 = vmax.xlane.f32.xlu0 %v353
    %v379 = vpop.xlane.xlu0 %378
    %380 = vmax.xlane.f32.xlu0 %v354
    %v381 = vpop.xlane.xlu0 %380
    %382 = vmax.xlane.f32.xlu0 %v355
    %v383 = vpop.xlane.xlu0 %382
    %384 = vmax.xlane.f32.xlu0 %v356
    %v385 = vpop.xlane.xlu0 %384
    %386 = vmax.xlane.f32.xlu0 %v357
    %v387 = vpop.xlane.xlu0 %386
    %388 = vmax.xlane.f32.xlu0 %v358
    %v389 = vpop.xlane.xlu0 %388
    %390 = vmax.xlane.f32.xlu0 %v359
    %v391 = vpop.xlane.xlu0 %390
    %v392 = vsub.f32 %v344, %v361
    %v393 = vsub.f32 %v345, %v363
    %v394 = vsub.f32 %v346, %v365
    %v395 = vsub.f32 %v347, %v367
    %v396 = vsub.f32 %v348, %v369
    %v397 = vsub.f32 %v349, %v371
    %v398 = vsub.f32 %v350, %v373
    %v399 = vsub.f32 %v351, %v375
    %v400 = vsub.f32 %v352, %v377
    %v401 = vsub.f32 %v353, %v379
    %v402 = vsub.f32 %v354, %v381
    %v403 = vsub.f32 %v355, %v383
    %v404 = vsub.f32 %v356, %v385
    %v405 = vsub.f32 %v357, %v387
    %v406 = vsub.f32 %v358, %v389
    %v407 = vsub.f32 %v359, %v391
    %v408 = vmul.f32 %v392, 1.442695
    %v409 = vpow.pop %v408
    %v410 = vmul.f32 %v393, 1.442695
    %v411 = vpow.pop %v410
    %v412 = vmul.f32 %v394, 1.442695
    %v413 = vpow.pop %v412
    %v414 = vmul.f32 %v395, 1.442695
    %v415 = vpow.pop %v414
    %v416 = vmul.f32 %v396, 1.442695
    %v417 = vpow.pop %v416
    %v418 = vmul.f32 %v397, 1.442695
    %v419 = vpow.pop %v418
    %v420 = vmul.f32 %v398, 1.442695
    %v421 = vpow.pop %v420
    %v422 = vmul.f32 %v399, 1.442695
    %v423 = vpow.pop %v422
    %v424 = vmul.f32 %v400, 1.442695
    %v425 = vpow.pop %v424
    %v426 = vmul.f32 %v401, 1.442695
    %v427 = vpow.pop %v426
    %v428 = vmul.f32 %v402, 1.442695
    %v429 = vpow.pop %v428
    %v430 = vmul.f32 %v403, 1.442695
    %v431 = vpow.pop %v430
    %v432 = vmul.f32 %v404, 1.442695
    %v433 = vpow.pop %v432
    %v434 = vmul.f32 %v405, 1.442695
    %v435 = vpow.pop %v434
    %v436 = vmul.f32 %v406, 1.442695
    %v437 = vpow.pop %v436
    %v438 = vmul.f32 %v407, 1.442695
    %v439 = vpow.pop %v438
    %440 = vadd.xlane.f32.xlu0 %v409
    %v441 = vpop.xlane.xlu0 %440
    %442 = vadd.xlane.f32.xlu0 %v411
    %v443 = vpop.xlane.xlu0 %442
    %444 = vadd.xlane.f32.xlu0 %v413
    %v445 = vpop.xlane.xlu0 %444
    %446 = vadd.xlane.f32.xlu0 %v415
    %v447 = vpop.xlane.xlu0 %446
    %448 = vadd.xlane.f32.xlu0 %v417
    %v449 = vpop.xlane.xlu0 %448
    %450 = vadd.xlane.f32.xlu0 %v419
    %v451 = vpop.xlane.xlu0 %450
    %452 = vadd.xlane.f32.xlu0 %v421
    %v453 = vpop.xlane.xlu0 %452
    %454 = vadd.xlane.f32.xlu0 %v423
    %v455 = vpop.xlane.xlu0 %454
    %456 = vadd.xlane.f32.xlu0 %v425
    %v457 = vpop.xlane.xlu0 %456
    %458 = vadd.xlane.f32.xlu0 %v427
    %v459 = vpop.xlane.xlu0 %458
    %460 = vadd.xlane.f32.xlu0 %v429
    %v461 = vpop.xlane.xlu0 %460
    %462 = vadd.xlane.f32.xlu0 %v431
    %v463 = vpop.xlane.xlu0 %462
    %464 = vadd.xlane.f32.xlu0 %v433
    %v465 = vpop.xlane.xlu0 %464
    %466 = vadd.xlane.f32.xlu0 %v435
    %v467 = vpop.xlane.xlu0 %466
    %468 = vadd.xlane.f32.xlu0 %v437
    %v469 = vpop.xlane.xlu0 %468
    %470 = vadd.xlane.f32.xlu0 %v439
    %v471 = vpop.xlane.xlu0 %470
    %v472 = vrcp.pop %v441
    %v473 = vmul.f32 %v441, %v472
    %v474 = vsub.f32 1.0, %v473
    %v475 = vmul.f32 %v472, %v474
    %v476 = vadd.f32 %v472, %v475
    %vm477 = vweird.f32 %v441
    %vm478 = vweird.f32 %v472
    %vm479 = vmor %vm477, %vm478
    %v480 = vsel %vm479, %v472, %v476
    %v481 = vand.u32 2147483647, %v441
    %vm482 = vcmp.eq.f32.partialorder %v481, 8.507059e+37
    %v483 = vand.u32 %v441, 2147483648
    %v484 = vor.u32 1.1754944e-38, %v483
    %v485 = vsel %vm482, %v484, %v480
    %v486 = vrcp.pop %v443
    %v487 = vmul.f32 %v443, %v486
    %v488 = vsub.f32 1.0, %v487
    %v489 = vmul.f32 %v486, %v488
    %v490 = vadd.f32 %v486, %v489
    %vm491 = vweird.f32 %v443
    %vm492 = vweird.f32 %v486
    %vm493 = vmor %vm491, %vm492
    %v494 = vsel %vm493, %v486, %v490
    %v495 = vand.u32 2147483647, %v443
    %vm496 = vcmp.eq.f32.partialorder %v495, 8.507059e+37
    %v497 = vand.u32 %v443, 2147483648
    %v498 = vor.u32 1.1754944e-38, %v497
    %v499 = vsel %vm496, %v498, %v494
    %v500 = vrcp.pop %v445
    %v501 = vmul.f32 %v445, %v500
    %v502 = vsub.f32 1.0, %v501
    %v503 = vmul.f32 %v500, %v502
    %v504 = vadd.f32 %v500, %v503
    %vm505 = vweird.f32 %v445
    %vm506 = vweird.f32 %v500
    %vm507 = vmor %vm505, %vm506
    %v508 = vsel %vm507, %v500, %v504
    %v509 = vand.u32 2147483647, %v445
    %vm510 = vcmp.eq.f32.partialorder %v509, 8.507059e+37
    %v511 = vand.u32 %v445, 2147483648
    %v512 = vor.u32 1.1754944e-38, %v511
    %v513 = vsel %vm510, %v512, %v508
    %v514 = vrcp.pop %v447
    %v515 = vmul.f32 %v447, %v514
    %v516 = vsub.f32 1.0, %v515
    %v517 = vmul.f32 %v514, %v516
    %v518 = vadd.f32 %v514, %v517
    %vm519 = vweird.f32 %v447
    %vm520 = vweird.f32 %v514
    %vm521 = vmor %vm519, %vm520
    %v522 = vsel %vm521, %v514, %v518
    %v523 = vand.u32 2147483647, %v447
    %vm524 = vcmp.eq.f32.partialorder %v523, 8.507059e+37
    %v525 = vand.u32 %v447, 2147483648
    %v526 = vor.u32 1.1754944e-38, %v525
    %v527 = vsel %vm524, %v526, %v522
    %v528 = vrcp.pop %v449
    %v529 = vmul.f32 %v449, %v528
    %v530 = vsub.f32 1.0, %v529
    %v531 = vmul.f32 %v528, %v530
    %v532 = vadd.f32 %v528, %v531
    %vm533 = vweird.f32 %v449
    %vm534 = vweird.f32 %v528
    %vm535 = vmor %vm533, %vm534
    %v536 = vsel %vm535, %v528, %v532
    %v537 = vand.u32 2147483647, %v449
    %vm538 = vcmp.eq.f32.partialorder %v537, 8.507059e+37
    %v539 = vand.u32 %v449, 2147483648
    %v540 = vor.u32 1.1754944e-38, %v539
    %v541 = vsel %vm538, %v540, %v536
    %v542 = vrcp.pop %v451
    %v543 = vmul.f32 %v451, %v542
    %v544 = vsub.f32 1.0, %v543
    %v545 = vmul.f32 %v542, %v544
    %v546 = vadd.f32 %v542, %v545
    %vm547 = vweird.f32 %v451
    %vm548 = vweird.f32 %v542
    %vm549 = vmor %vm547, %vm548
    %v550 = vsel %vm549, %v542, %v546
    %v551 = vand.u32 2147483647, %v451
    %vm552 = vcmp.eq.f32.partialorder %v551, 8.507059e+37
    %v553 = vand.u32 %v451, 2147483648
    %v554 = vor.u32 1.1754944e-38, %v553
    %v555 = vsel %vm552, %v554, %v550
    %v556 = vrcp.pop %v453
    %v557 = vmul.f32 %v453, %v556
    %v558 = vsub.f32 1.0, %v557
    %v559 = vmul.f32 %v556, %v558
    %v560 = vadd.f32 %v556, %v559
    %vm561 = vweird.f32 %v453
    %vm562 = vweird.f32 %v556
    %vm563 = vmor %vm561, %vm562
    %v564 = vsel %vm563, %v556, %v560
    %v565 = vand.u32 2147483647, %v453
    %vm566 = vcmp.eq.f32.partialorder %v565, 8.507059e+37
    %v567 = vand.u32 %v453, 2147483648
    %v568 = vor.u32 1.1754944e-38, %v567
    %v569 = vsel %vm566, %v568, %v564
    %v570 = vrcp.pop %v455
    %v571 = vmul.f32 %v455, %v570
    %v572 = vsub.f32 1.0, %v571
    %v573 = vmul.f32 %v570, %v572
    %v574 = vadd.f32 %v570, %v573
    %vm575 = vweird.f32 %v455
    %vm576 = vweird.f32 %v570
    %vm577 = vmor %vm575, %vm576
    %v578 = vsel %vm577, %v570, %v574
    %v579 = vand.u32 2147483647, %v455
    %vm580 = vcmp.eq.f32.partialorder %v579, 8.507059e+37
    %v581 = vand.u32 %v455, 2147483648
    %v582 = vor.u32 1.1754944e-38, %v581
    %v583 = vsel %vm580, %v582, %v578
    %v584 = vrcp.pop %v457
    %v585 = vmul.f32 %v457, %v584
    %v586 = vsub.f32 1.0, %v585
    %v587 = vmul.f32 %v584, %v586
    %v588 = vadd.f32 %v584, %v587
    %vm589 = vweird.f32 %v457
    %vm590 = vweird.f32 %v584
    %vm591 = vmor %vm589, %vm590
    %v592 = vsel %vm591, %v584, %v588
    %v593 = vand.u32 2147483647, %v457
    %vm594 = vcmp.eq.f32.partialorder %v593, 8.507059e+37
    %v595 = vand.u32 %v457, 2147483648
    %v596 = vor.u32 1.1754944e-38, %v595
    %v597 = vsel %vm594, %v596, %v592
    %v598 = vrcp.pop %v459
    %v599 = vmul.f32 %v459, %v598
    %v600 = vsub.f32 1.0, %v599
    %v601 = vmul.f32 %v598, %v600
    %v602 = vadd.f32 %v598, %v601
    %vm603 = vweird.f32 %v459
    %vm604 = vweird.f32 %v598
    %vm605 = vmor %vm603, %vm604
    %v606 = vsel %vm605, %v598, %v602
    %v607 = vand.u32 2147483647, %v459
    %vm608 = vcmp.eq.f32.partialorder %v607, 8.507059e+37
    %v609 = vand.u32 %v459, 2147483648
    %v610 = vor.u32 1.1754944e-38, %v609
    %v611 = vsel %vm608, %v610, %v606
    %v612 = vrcp.pop %v461
    %v613 = vmul.f32 %v461, %v612
    %v614 = vsub.f32 1.0, %v613
    %v615 = vmul.f32 %v612, %v614
    %v616 = vadd.f32 %v612, %v615
    %vm617 = vweird.f32 %v461
    %vm618 = vweird.f32 %v612
    %vm619 = vmor %vm617, %vm618
    %v620 = vsel %vm619, %v612, %v616
    %v621 = vand.u32 2147483647, %v461
    %vm622 = vcmp.eq.f32.partialorder %v621, 8.507059e+37
    %v623 = vand.u32 %v461, 2147483648
    %v624 = vor.u32 1.1754944e-38, %v623
    %v625 = vsel %vm622, %v624, %v620
    %v626 = vrcp.pop %v463
    %v627 = vmul.f32 %v463, %v626
    %v628 = vsub.f32 1.0, %v627
    %v629 = vmul.f32 %v626, %v628
    %v630 = vadd.f32 %v626, %v629
    %vm631 = vweird.f32 %v463
    %vm632 = vweird.f32 %v626
    %vm633 = vmor %vm631, %vm632
    %v634 = vsel %vm633, %v626, %v630
    %v635 = vand.u32 2147483647, %v463
    %vm636 = vcmp.eq.f32.partialorder %v635, 8.507059e+37
    %v637 = vand.u32 %v463, 2147483648
    %v638 = vor.u32 1.1754944e-38, %v637
    %v639 = vsel %vm636, %v638, %v634
    %v640 = vrcp.pop %v465
    %v641 = vmul.f32 %v465, %v640
    %v642 = vsub.f32 1.0, %v641
    %v643 = vmul.f32 %v640, %v642
    %v644 = vadd.f32 %v640, %v643
    %vm645 = vweird.f32 %v465
    %vm646 = vweird.f32 %v640
    %vm647 = vmor %vm645, %vm646
    %v648 = vsel %vm647, %v640, %v644
    %v649 = vand.u32 2147483647, %v465
    %vm650 = vcmp.eq.f32.partialorder %v649, 8.507059e+37
    %v651 = vand.u32 %v465, 2147483648
    %v652 = vor.u32 1.1754944e-38, %v651
    %v653 = vsel %vm650, %v652, %v648
    %v654 = vrcp.pop %v467
    %v655 = vmul.f32 %v467, %v654
    %v656 = vsub.f32 1.0, %v655
    %v657 = vmul.f32 %v654, %v656
    %v658 = vadd.f32 %v654, %v657
    %vm659 = vweird.f32 %v467
    %vm660 = vweird.f32 %v654
    %vm661 = vmor %vm659, %vm660
    %v662 = vsel %vm661, %v654, %v658
    %v663 = vand.u32 2147483647, %v467
    %vm664 = vcmp.eq.f32.partialorder %v663, 8.507059e+37
    %v665 = vand.u32 %v467, 2147483648
    %v666 = vor.u32 1.1754944e-38, %v665
    %v667 = vsel %vm664, %v666, %v662
    %v668 = vrcp.pop %v469
    %v669 = vmul.f32 %v469, %v668
    %v670 = vsub.f32 1.0, %v669
    %v671 = vmul.f32 %v668, %v670
    %v672 = vadd.f32 %v668, %v671
    %vm673 = vweird.f32 %v469
    %vm674 = vweird.f32 %v668
    %vm675 = vmor %vm673, %vm674
    %v676 = vsel %vm675, %v668, %v672
    %v677 = vand.u32 2147483647, %v469
    %vm678 = vcmp.eq.f32.partialorder %v677, 8.507059e+37
    %v679 = vand.u32 %v469, 2147483648
    %v680 = vor.u32 1.1754944e-38, %v679
    %v681 = vsel %vm678, %v680, %v676
    %v682 = vrcp.pop %v471
    %v683 = vmul.f32 %v471, %v682
    %v684 = vsub.f32 1.0, %v683
    %v685 = vmul.f32 %v682, %v684
    %v686 = vadd.f32 %v682, %v685
    %vm687 = vweird.f32 %v471
    %vm688 = vweird.f32 %v682
    %vm689 = vmor %vm687, %vm688
    %v690 = vsel %vm689, %v682, %v686
    %v691 = vand.u32 2147483647, %v471
    %vm692 = vcmp.eq.f32.partialorder %v691, 8.507059e+37
    %v693 = vand.u32 %v471, 2147483648
    %v694 = vor.u32 1.1754944e-38, %v693
    %v695 = vsel %vm692, %v694, %v690
    %v696 = vmul.f32 %v409, %v485
    %v697 = vmul.f32 %v411, %v499
    %v698 = vmul.f32 %v413, %v513
    %v699 = vmul.f32 %v415, %v527
    %v700 = vmul.f32 %v417, %v541
    %v701 = vmul.f32 %v419, %v555
    %v702 = vmul.f32 %v421, %v569
    %v703 = vmul.f32 %v423, %v583
    %v704 = vmul.f32 %v425, %v597
    %v705 = vmul.f32 %v427, %v611
    %v706 = vmul.f32 %v429, %v625
    %v707 = vmul.f32 %v431, %v639
    %v708 = vmul.f32 %v433, %v653
    %v709 = vmul.f32 %v435, %v667
    %v710 = vmul.f32 %v437, %v681
    %v711 = vmul.f32 %v439, %v695
    %712 = vmatpush.msra.mxu0 %v181
    %713 = vmatpush.msra.mxu0 %v180
    %714 = vmatpush.msra.mxu0 %v179
    %715 = vmatpush.msra.mxu0 %v178
    %716 = vmatpush.msra.mxu0 %v177
    %717 = vmatpush.msra.mxu0 %v176
    %718 = vmatpush.msra.mxu0 %v175
    %719 = vmatpush.msra.mxu0 %v174
    %720 = vmatpush.msra.mxu0 %v173
    %721 = vmatpush.msra.mxu0 %v172
    %722 = vmatpush.msra.mxu0 %v171
    %723 = vmatpush.msra.mxu0 %v170
    %724 = vmatpush.msra.mxu0 %v169
    %725 = vmatpush.msra.mxu0 %v168
    %726 = vmatpush.msra.mxu0 %v167
    %727 = vmatpush.msra.mxu0 %v166
    %728 = vmatmul.f32.gmra.mxu0 %v696
    %v729 = vpop.f32.mrf.mxu0
    %v730 = vadd.f32 0.0, %v729
    %731 = vmatmul.f32.gmra.mxu0 %v697
    %v732 = vpop.f32.mrf.mxu0
    %v733 = vadd.f32 0.0, %v732
    %734 = vmatmul.f32.gmra.mxu0 %v698
    %v735 = vpop.f32.mrf.mxu0
    %v736 = vadd.f32 0.0, %v735
    %737 = vmatmul.f32.gmra.mxu0 %v699
    %v738 = vpop.f32.mrf.mxu0
    %v739 = vadd.f32 0.0, %v738
    %740 = vmatmul.f32.gmra.mxu0 %v700
    %v741 = vpop.f32.mrf.mxu0
    %v742 = vadd.f32 0.0, %v741
    %743 = vmatmul.f32.gmra.mxu0 %v701
    %v744 = vpop.f32.mrf.mxu0
    %v745 = vadd.f32 0.0, %v744
    %746 = vmatmul.f32.gmra.mxu0 %v702
    %v747 = vpop.f32.mrf.mxu0
    %v748 = vadd.f32 0.0, %v747
    %749 = vmatmul.f32.gmra.mxu0 %v703
    %v750 = vpop.f32.mrf.mxu0
    %v751 = vadd.f32 0.0, %v750
    %752 = vmatmul.f32.gmra.mxu0 %v704
    %v753 = vpop.f32.mrf.mxu0
    %v754 = vadd.f32 0.0, %v753
    %755 = vmatmul.f32.gmra.mxu0 %v705
    %v756 = vpop.f32.mrf.mxu0
    %v757 = vadd.f32 0.0, %v756
    %758 = vmatmul.f32.gmra.mxu0 %v706
    %v759 = vpop.f32.mrf.mxu0
    %v760 = vadd.f32 0.0, %v759
    %761 = vmatmul.f32.gmra.mxu0 %v707
    %v762 = vpop.f32.mrf.mxu0
    %v763 = vadd.f32 0.0, %v762
    %764 = vmatmul.f32.gmra.mxu0 %v708
    %v765 = vpop.f32.mrf.mxu0
    %v766 = vadd.f32 0.0, %v765
    %767 = vmatmul.f32.gmra.mxu0 %v709
    %v768 = vpop.f32.mrf.mxu0
    %v769 = vadd.f32 0.0, %v768
    %770 = vmatmul.f32.gmra.mxu0 %v710
    %v771 = vpop.f32.mrf.mxu0
    %v772 = vadd.f32 0.0, %v771
    %773 = vmatmul.f32.gmra.mxu0 %v711
    %v774 = vpop.f32.mrf.mxu0
    %v775 = vadd.f32 0.0, %v774
    %776 = vdwg.mxu0
    %v778 = vsel %vm182, %v730, 0
    %v781 = vsel %vm182, %v733, 0
    %v784 = vsel %vm182, %v736, 0
    %v787 = vsel %vm182, %v739, 0
    %v790 = vsel %vm182, %v742, 0
    %v793 = vsel %vm182, %v745, 0
    %v796 = vsel %vm182, %v748, 0
    %v799 = vsel %vm182, %v751, 0
    %v802 = vsel %vm182, %v754, 0
    %v805 = vsel %vm182, %v757, 0
    %v808 = vsel %vm182, %v760, 0
    %v811 = vsel %vm182, %v763, 0
    %v814 = vsel %vm182, %v766, 0
    %v817 = vsel %vm182, %v769, 0
    %v820 = vsel %vm182, %v772, 0
    %v823 = vsel %vm182, %v775, 0
    %825 = vmatpush.msra.mxu0 0.0
    %826 = vmatpush.msra.mxu0 0.0
    %827 = vmatpush.msra.mxu0 0.0
    %828 = vmatpush.msra.mxu0 0.0
    %829 = vmatpush.msra.mxu0 0.0
    %830 = vmatpush.msra.mxu0 0.0
    %831 = vmatpush.msra.mxu0 0.0
    %832 = vmatpush.msra.mxu0 0.0
    %833 = vmatpush.msra.mxu0 0.0
    %834 = vmatpush.msra.mxu0 0.0
    %835 = vmatpush.msra.mxu0 0.0
    %836 = vmatpush.msra.mxu0 0.0
    %837 = vmatpush.msra.mxu0 %v148
    %838 = vmatpush.msra.mxu0 %v147
    %839 = vmatpush.msra.mxu0 %v146
    %840 = vmatpush.msra.mxu0 %v145
    %841 = vmatmul.f32.gmra.mxu0 %v778
    %v842 = vpop.f32.mrf.mxu0
    %v843 = vadd.f32 0.0, %v842
    %844 = vmatmul.f32.gmra.mxu0 %v781
    %v845 = vpop.f32.mrf.mxu0
    %v846 = vadd.f32 0.0, %v845
    %847 = vmatmul.f32.gmra.mxu0 %v784
    %v848 = vpop.f32.mrf.mxu0
    %v849 = vadd.f32 0.0, %v848
    %850 = vmatmul.f32.gmra.mxu0 %v787
    %v851 = vpop.f32.mrf.mxu0
    %v852 = vadd.f32 0.0, %v851
    %853 = vmatmul.f32.gmra.mxu0 %v790
    %v854 = vpop.f32.mrf.mxu0
    %v855 = vadd.f32 0.0, %v854
    %856 = vmatmul.f32.gmra.mxu0 %v793
    %v857 = vpop.f32.mrf.mxu0
    %v858 = vadd.f32 0.0, %v857
    %859 = vmatmul.f32.gmra.mxu0 %v796
    %v860 = vpop.f32.mrf.mxu0
    %v861 = vadd.f32 0.0, %v860
    %862 = vmatmul.f32.gmra.mxu0 %v799
    %v863 = vpop.f32.mrf.mxu0
    %v864 = vadd.f32 0.0, %v863
    %865 = vmatmul.f32.gmra.mxu0 %v802
    %v866 = vpop.f32.mrf.mxu0
    %v867 = vadd.f32 0.0, %v866
    %868 = vmatmul.f32.gmra.mxu0 %v805
    %v869 = vpop.f32.mrf.mxu0
    %v870 = vadd.f32 0.0, %v869
    %871 = vmatmul.f32.gmra.mxu0 %v808
    %v872 = vpop.f32.mrf.mxu0
    %v873 = vadd.f32 0.0, %v872
    %874 = vmatmul.f32.gmra.mxu0 %v811
    %v875 = vpop.f32.mrf.mxu0
    %v876 = vadd.f32 0.0, %v875
    %877 = vmatmul.f32.gmra.mxu0 %v814
    %v878 = vpop.f32.mrf.mxu0
    %v879 = vadd.f32 0.0, %v878
    %880 = vmatmul.f32.gmra.mxu0 %v817
    %v881 = vpop.f32.mrf.mxu0
    %v882 = vadd.f32 0.0, %v881
    %883 = vmatmul.f32.gmra.mxu0 %v820
    %v884 = vpop.f32.mrf.mxu0
    %v885 = vadd.f32 0.0, %v884
    %886 = vmatmul.f32.gmra.mxu0 %v823
    %v887 = vpop.f32.mrf.mxu0
    %v888 = vadd.f32 0.0, %v887
    %889 = vdwg.mxu0
    %890 = vmatpush.msra.mxu0 0.0
    %891 = vmatpush.msra.mxu0 0.0
    %892 = vmatpush.msra.mxu0 0.0
    %893 = vmatpush.msra.mxu0 0.0
    %894 = vmatpush.msra.mxu0 0.0
    %895 = vmatpush.msra.mxu0 0.0
    %896 = vmatpush.msra.mxu0 0.0
    %897 = vmatpush.msra.mxu0 0.0
    %898 = vmatpush.msra.mxu0 0.0
    %899 = vmatpush.msra.mxu0 0.0
    %900 = vmatpush.msra.mxu0 0.0
    %901 = vmatpush.msra.mxu0 0.0
    %902 = vmatpush.msra.mxu0 %v144
    %903 = vmatpush.msra.mxu0 %v143
    %904 = vmatpush.msra.mxu0 %v142
    %905 = vmatpush.msra.mxu0 %v141
    %906 = vmatmul.f32.gmra.mxu0 %v184
    %v907 = vpop.f32.mrf.mxu0
    %v908 = vadd.f32 %v843, %v907
    %909 = vmatmul.f32.gmra.mxu0 %v187
    %v910 = vpop.f32.mrf.mxu0
    %v911 = vadd.f32 %v846, %v910
    %912 = vmatmul.f32.gmra.mxu0 %v190
    %v913 = vpop.f32.mrf.mxu0
    %v914 = vadd.f32 %v849, %v913
    %915 = vmatmul.f32.gmra.mxu0 %v193
    %v916 = vpop.f32.mrf.mxu0
    %v917 = vadd.f32 %v852, %v916
    %918 = vmatmul.f32.gmra.mxu0 %v196
    %v919 = vpop.f32.mrf.mxu0
    %v920 = vadd.f32 %v855, %v919
    %921 = vmatmul.f32.gmra.mxu0 %v199
    %v922 = vpop.f32.mrf.mxu0
    %v923 = vadd.f32 %v858, %v922
    %924 = vmatmul.f32.gmra.mxu0 %v202
    %v925 = vpop.f32.mrf.mxu0
    %v926 = vadd.f32 %v861, %v925
    %927 = vmatmul.f32.gmra.mxu0 %v205
    %v928 = vpop.f32.mrf.mxu0
    %v929 = vadd.f32 %v864, %v928
    %930 = vmatmul.f32.gmra.mxu0 %v208
    %v931 = vpop.f32.mrf.mxu0
    %v932 = vadd.f32 %v867, %v931
    %933 = vmatmul.f32.gmra.mxu0 %v211
    %v934 = vpop.f32.mrf.mxu0
    %v935 = vadd.f32 %v870, %v934
    %936 = vmatmul.f32.gmra.mxu0 %v214
    %v937 = vpop.f32.mrf.mxu0
    %v938 = vadd.f32 %v873, %v937
    %939 = vmatmul.f32.gmra.mxu0 %v217
    %v940 = vpop.f32.mrf.mxu0
    %v941 = vadd.f32 %v876, %v940
    %942 = vmatmul.f32.gmra.mxu0 %v220
    %v943 = vpop.f32.mrf.mxu0
    %v944 = vadd.f32 %v879, %v943
    %945 = vmatmul.f32.gmra.mxu0 %v223
    %v946 = vpop.f32.mrf.mxu0
    %v947 = vadd.f32 %v882, %v946
    %948 = vmatmul.f32.gmra.mxu0 %v226
    %v949 = vpop.f32.mrf.mxu0
    %v950 = vadd.f32 %v885, %v949
    %951 = vmatmul.f32.gmra.mxu0 %v229
    %v952 = vpop.f32.mrf.mxu0
    %v953 = vadd.f32 %v888, %v952
    %954 = vdwg.mxu0
    %v956 = vperm.slane %v149, 0
    %v958 = vadd.f32 %v908, %v956
    %v959 = vadd.f32 %v911, %v956
    %v960 = vadd.f32 %v914, %v956
    %v961 = vadd.f32 %v917, %v956
    %v962 = vadd.f32 %v920, %v956
    %v963 = vadd.f32 %v923, %v956
    %v964 = vadd.f32 %v926, %v956
    %v965 = vadd.f32 %v929, %v956
    %v966 = vadd.f32 %v932, %v956
    %v967 = vadd.f32 %v935, %v956
    %v968 = vadd.f32 %v938, %v956
    %v969 = vadd.f32 %v941, %v956
    %v970 = vadd.f32 %v944, %v956
    %v971 = vadd.f32 %v947, %v956
    %v972 = vadd.f32 %v950, %v956
    %v973 = vadd.f32 %v953, %v956
    %v974 = vtanh.pop %v958
    %v975 = vtanh.pop %v959
    %v976 = vtanh.pop %v960
    %v977 = vtanh.pop %v961
    %v978 = vtanh.pop %v962
    %v979 = vtanh.pop %v963
    %v980 = vtanh.pop %v964
    %v981 = vtanh.pop %v965
    %v982 = vtanh.pop %v966
    %v983 = vtanh.pop %v967
    %v984 = vtanh.pop %v968
    %v985 = vtanh.pop %v969
    %v986 = vtanh.pop %v970
    %v987 = vtanh.pop %v971
    %v988 = vtanh.pop %v972
    %v989 = vtanh.pop %v973
    %v990 = vsel %vm125, 1, 0
    %v991 = vsel %vm126, 1, 0
    %v992 = vsel %vm127, 1, 0
    %v993 = vsel %vm128, 1, 0
    %v994 = vsel %vm129, 1, 0
    %v995 = vsel %vm130, 1, 0
    %v996 = vsel %vm131, 1, 0
    %v997 = vsel %vm132, 1, 0
    %v998 = vsel %vm133, 1, 0
    %v999 = vsel %vm134, 1, 0
    %v1000 = vsel %vm135, 1, 0
    %v1001 = vsel %vm136, 1, 0
    %v1002 = vsel %vm137, 1, 0
    %v1003 = vsel %vm138, 1, 0
    %v1004 = vsel %vm139, 1, 0
    %v1005 = vsel %vm140, 1, 0
    %vm1006 = vcmp.eq.s32.totalorder %v990, 1
    %vm1007 = vcmp.eq.s32.totalorder %v991, 1
    %vm1008 = vcmp.eq.s32.totalorder %v992, 1
    %vm1009 = vcmp.eq.s32.totalorder %v993, 1
    %vm1010 = vcmp.eq.s32.totalorder %v994, 1
    %vm1011 = vcmp.eq.s32.totalorder %v995, 1
    %vm1012 = vcmp.eq.s32.totalorder %v996, 1
    %vm1013 = vcmp.eq.s32.totalorder %v997, 1
    %vm1014 = vcmp.eq.s32.totalorder %v998, 1
    %vm1015 = vcmp.eq.s32.totalorder %v999, 1
    %vm1016 = vcmp.eq.s32.totalorder %v1000, 1
    %vm1017 = vcmp.eq.s32.totalorder %v1001, 1
    %vm1018 = vcmp.eq.s32.totalorder %v1002, 1
    %vm1019 = vcmp.eq.s32.totalorder %v1003, 1
    %vm1020 = vcmp.eq.s32.totalorder %v1004, 1
    %vm1021 = vcmp.eq.s32.totalorder %v1005, 1
    %v1022 = vsel %vm1006, %v150, %v974
    %v1023 = vsel %vm1007, %v151, %v975
    %v1024 = vsel %vm1008, %v152, %v976
    %v1025 = vsel %vm1009, %v153, %v977
    %v1026 = vsel %vm1010, %v154, %v978
    %v1027 = vsel %vm1011, %v155, %v979
    %v1028 = vsel %vm1012, %v156, %v980
    %v1029 = vsel %vm1013, %v157, %v981
    %v1030 = vsel %vm1014, %v158, %v982
    %v1031 = vsel %vm1015, %v159, %v983
    %v1032 = vsel %vm1016, %v160, %v984
    %v1033 = vsel %vm1017, %v161, %v985
    %v1034 = vsel %vm1018, %v162, %v986
    %v1035 = vsel %vm1019, %v163, %v987
    %v1036 = vsel %vm1020, %v164, %v988
    %v1037 = vsel %vm1021, %v165, %v989
    %1038 = vst.msk [vmem:[%s5] sm:$0xff] %vm182, %v1022
    %1039 = vst.msk [vmem:[%s5 + $0x8] sm:$0xff] %vm182, %v1023
    %1040 = vst.msk [vmem:[%s5 + $0x10] sm:$0xff] %vm182, %v1024
    %1041 = vst.msk [vmem:[%s5 + $0x18] sm:$0xff] %vm182, %v1025
    %1042 = vst.msk [vmem:[%s5 + $0x20] sm:$0xff] %vm182, %v1026
    %1043 = vst.msk [vmem:[%s5 + $0x28] sm:$0xff] %vm182, %v1027
    %1044 = vst.msk [vmem:[%s5 + $0x30] sm:$0xff] %vm182, %v1028
    %1045 = vst.msk [vmem:[%s5 + $0x38] sm:$0xff] %vm182, %v1029
    %1046 = vst.msk [vmem:[%s5 + $0x40] sm:$0xff] %vm182, %v1030
    %1047 = vst.msk [vmem:[%s5 + $0x48] sm:$0xff] %vm182, %v1031
    %1048 = vst.msk [vmem:[%s5 + $0x50] sm:$0xff] %vm182, %v1032
    %1049 = vst.msk [vmem:[%s5 + $0x58] sm:$0xff] %vm182, %v1033
    %1050 = vst.msk [vmem:[%s5 + $0x60] sm:$0xff] %vm182, %v1034
    %1051 = vst.msk [vmem:[%s5 + $0x68] sm:$0xff] %vm182, %v1035
    %1052 = vst.msk [vmem:[%s5 + $0x70] sm:$0xff] %vm182, %v1036
    %1053 = vst.msk [vmem:[%s5 + $0x78] sm:$0xff] %vm182, %v1037
    %1054 = vst [vmem:[#allocation2] sm:$0xff] %v696
    %1055 = vst [vmem:[#allocation2 + $0x8] sm:$0xff] %v697
    %1056 = vst [vmem:[#allocation2 + $0x10] sm:$0xff] %v698
    %1057 = vst [vmem:[#allocation2 + $0x18] sm:$0xff] %v699
    %1058 = vst [vmem:[#allocation2 + $0x20] sm:$0xff] %v700
    %1059 = vst [vmem:[#allocation2 + $0x28] sm:$0xff] %v701
    %1060 = vst [vmem:[#allocation2 + $0x30] sm:$0xff] %v702
    %1061 = vst [vmem:[#allocation2 + $0x38] sm:$0xff] %v703
    %1062 = vst [vmem:[#allocation2 + $0x40] sm:$0xff] %v704
    %1063 = vst [vmem:[#allocation2 + $0x48] sm:$0xff] %v705
    %1064 = vst [vmem:[#allocation2 + $0x50] sm:$0xff] %v706
    %1065 = vst [vmem:[#allocation2 + $0x58] sm:$0xff] %v707
    %1066 = vst [vmem:[#allocation2 + $0x60] sm:$0xff] %v708
    %1067 = vst [vmem:[#allocation2 + $0x68] sm:$0xff] %v709
    %1068 = vst [vmem:[#allocation2 + $0x70] sm:$0xff] %v710
    %1069 = vst [vmem:[#allocation2 + $0x78] sm:$0xff] %v711
    %s1070 = scalar_lea.vmem %s0, 128
    %v1071 = vld [vmem:[%s1070] sm:$0xff]
    %v1072 = vld [vmem:[%s1070 + $0x8] sm:$0xff]
    %v1073 = vld [vmem:[%s1070 + $0x10] sm:$0xff]
    %v1074 = vld [vmem:[%s1070 + $0x18] sm:$0xff]
    %v1075 = vld [vmem:[%s1070 + $0x20] sm:$0xff]
    %v1076 = vld [vmem:[%s1070 + $0x28] sm:$0xff]
    %v1077 = vld [vmem:[%s1070 + $0x30] sm:$0xff]
    %v1078 = vld [vmem:[%s1070 + $0x38] sm:$0xff]
    %v1079 = vld [vmem:[%s1070 + $0x40] sm:$0xff]
    %v1080 = vld [vmem:[%s1070 + $0x48] sm:$0xff]
    %v1081 = vld [vmem:[%s1070 + $0x50] sm:$0xff]
    %v1082 = vld [vmem:[%s1070 + $0x58] sm:$0xff]
    %v1083 = vld [vmem:[%s1070 + $0x60] sm:$0xff]
    %v1084 = vld [vmem:[%s1070 + $0x68] sm:$0xff]
    %v1085 = vld [vmem:[%s1070 + $0x70] sm:$0xff]
    %v1086 = vld [vmem:[%s1070 + $0x78] sm:$0xff]
    %s1087 = scalar_lea.vmem %s1, 128
    %v1088 = vld [vmem:[%s1087] sm:$0xff]
    %v1089 = vld [vmem:[%s1087 + $0x8] sm:$0xff]
    %v1090 = vld [vmem:[%s1087 + $0x10] sm:$0xff]
    %v1091 = vld [vmem:[%s1087 + $0x18] sm:$0xff]
    %v1092 = vld [vmem:[%s1087 + $0x20] sm:$0xff]
    %v1093 = vld [vmem:[%s1087 + $0x28] sm:$0xff]
    %v1094 = vld [vmem:[%s1087 + $0x30] sm:$0xff]
    %v1095 = vld [vmem:[%s1087 + $0x38] sm:$0xff]
    %v1096 = vld [vmem:[%s1087 + $0x40] sm:$0xff]
    %v1097 = vld [vmem:[%s1087 + $0x48] sm:$0xff]
    %v1098 = vld [vmem:[%s1087 + $0x50] sm:$0xff]
    %v1099 = vld [vmem:[%s1087 + $0x58] sm:$0xff]
    %v1100 = vld [vmem:[%s1087 + $0x60] sm:$0xff]
    %v1101 = vld [vmem:[%s1087 + $0x68] sm:$0xff]
    %v1102 = vld [vmem:[%s1087 + $0x70] sm:$0xff]
    %v1103 = vld [vmem:[%s1087 + $0x78] sm:$0xff]
    %v1105 = vsel %vm182, %v1071, 0
    %v1108 = vsel %vm182, %v1072, 0
    %v1111 = vsel %vm182, %v1073, 0
    %v1114 = vsel %vm182, %v1074, 0
    %v1117 = vsel %vm182, %v1075, 0
    %v1120 = vsel %vm182, %v1076, 0
    %v1123 = vsel %vm182, %v1077, 0
    %v1126 = vsel %vm182, %v1078, 0
    %v1129 = vsel %vm182, %v1079, 0
    %v1132 = vsel %vm182, %v1080, 0
    %v1135 = vsel %vm182, %v1081, 0
    %v1138 = vsel %vm182, %v1082, 0
    %v1141 = vsel %vm182, %v1083, 0
    %v1144 = vsel %vm182, %v1084, 0
    %v1147 = vsel %vm182, %v1085, 0
    %v1150 = vsel %vm182, %v1086, 0
    %v1153 = vsel %vm182, %v1088, 0
    %v1156 = vsel %vm182, %v1089, 0
    %v1159 = vsel %vm182, %v1090, 0
    %v1162 = vsel %vm182, %v1091, 0
    %v1165 = vsel %vm182, %v1092, 0
    %v1168 = vsel %vm182, %v1093, 0
    %v1171 = vsel %vm182, %v1094, 0
    %v1174 = vsel %vm182, %v1095, 0
    %v1177 = vsel %vm182, %v1096, 0
    %v1180 = vsel %vm182, %v1097, 0
    %v1183 = vsel %vm182, %v1098, 0
    %v1186 = vsel %vm182, %v1099, 0
    %v1189 = vsel %vm182, %v1100, 0
    %v1192 = vsel %vm182, %v1101, 0
    %v1195 = vsel %vm182, %v1102, 0
    %v1198 = vsel %vm182, %v1103, 0
    %1200 = vmatpush.xpose.msra.mxu0 %v1198
    %1201 = vmatpush.xpose.msra.mxu0 %v1195
    %1202 = vmatpush.xpose.msra.mxu0 %v1192
    %1203 = vmatpush.xpose.msra.mxu0 %v1189
    %1204 = vmatpush.xpose.msra.mxu0 %v1186
    %1205 = vmatpush.xpose.msra.mxu0 %v1183
    %1206 = vmatpush.xpose.msra.mxu0 %v1180
    %1207 = vmatpush.xpose.msra.mxu0 %v1177
    %1208 = vmatpush.xpose.msra.mxu0 %v1174
    %1209 = vmatpush.xpose.msra.mxu0 %v1171
    %1210 = vmatpush.xpose.msra.mxu0 %v1168
    %1211 = vmatpush.xpose.msra.mxu0 %v1165
    %1212 = vmatpush.xpose.msra.mxu0 %v1162
    %1213 = vmatpush.xpose.msra.mxu0 %v1159
    %1214 = vmatpush.xpose.msra.mxu0 %v1156
    %1215 = vmatpush.xpose.msra.mxu0 %v1153
    %1216 = vmatmul.f32.gmra.mxu0 %v1105
    %v1217 = vpop.f32.mrf.mxu0
    %v1218 = vadd.f32 0.0, %v1217
    %1219 = vmatmul.f32.gmra.mxu0 %v1108
    %v1220 = vpop.f32.mrf.mxu0
    %v1221 = vadd.f32 0.0, %v1220
    %1222 = vmatmul.f32.gmra.mxu0 %v1111
    %v1223 = vpop.f32.mrf.mxu0
    %v1224 = vadd.f32 0.0, %v1223
    %1225 = vmatmul.f32.gmra.mxu0 %v1114
    %v1226 = vpop.f32.mrf.mxu0
    %v1227 = vadd.f32 0.0, %v1226
    %1228 = vmatmul.f32.gmra.mxu0 %v1117
    %v1229 = vpop.f32.mrf.mxu0
    %v1230 = vadd.f32 0.0, %v1229
    %1231 = vmatmul.f32.gmra.mxu0 %v1120
    %v1232 = vpop.f32.mrf.mxu0
    %v1233 = vadd.f32 0.0, %v1232
    %1234 = vmatmul.f32.gmra.mxu0 %v1123
    %v1235 = vpop.f32.mrf.mxu0
    %v1236 = vadd.f32 0.0, %v1235
    %1237 = vmatmul.f32.gmra.mxu0 %v1126
    %v1238 = vpop.f32.mrf.mxu0
    %v1239 = vadd.f32 0.0, %v1238
    %1240 = vmatmul.f32.gmra.mxu0 %v1129
    %v1241 = vpop.f32.mrf.mxu0
    %v1242 = vadd.f32 0.0, %v1241
    %1243 = vmatmul.f32.gmra.mxu0 %v1132
    %v1244 = vpop.f32.mrf.mxu0
    %v1245 = vadd.f32 0.0, %v1244
    %1246 = vmatmul.f32.gmra.mxu0 %v1135
    %v1247 = vpop.f32.mrf.mxu0
    %v1248 = vadd.f32 0.0, %v1247
    %1249 = vmatmul.f32.gmra.mxu0 %v1138
    %v1250 = vpop.f32.mrf.mxu0
    %v1251 = vadd.f32 0.0, %v1250
    %1252 = vmatmul.f32.gmra.mxu0 %v1141
    %v1253 = vpop.f32.mrf.mxu0
    %v1254 = vadd.f32 0.0, %v1253
    %1255 = vmatmul.f32.gmra.mxu0 %v1144
    %v1256 = vpop.f32.mrf.mxu0
    %v1257 = vadd.f32 0.0, %v1256
    %1258 = vmatmul.f32.gmra.mxu0 %v1147
    %v1259 = vpop.f32.mrf.mxu0
    %v1260 = vadd.f32 0.0, %v1259
    %1261 = vmatmul.f32.gmra.mxu0 %v1150
    %v1262 = vpop.f32.mrf.mxu0
    %v1263 = vadd.f32 0.0, %v1262
    %1264 = vdwg.mxu0
    %v1265 = vsel %vm109, %v1218, -1e+30
    %v1266 = vsel %vm110, %v1221, -1e+30
    %v1267 = vsel %vm111, %v1224, -1e+30
    %v1268 = vsel %vm112, %v1227, -1e+30
    %v1269 = vsel %vm113, %v1230, -1e+30
    %v1270 = vsel %vm114, %v1233, -1e+30
    %v1271 = vsel %vm115, %v1236, -1e+30
    %v1272 = vsel %vm116, %v1239, -1e+30
    %v1273 = vsel %vm117, %v1242, -1e+30
    %v1274 = vsel %vm118, %v1245, -1e+30
    %v1275 = vsel %vm119, %v1248, -1e+30
    %v1276 = vsel %vm120, %v1251, -1e+30
    %v1277 = vsel %vm121, %v1254, -1e+30
    %v1278 = vsel %vm122, %v1257, -1e+30
    %v1279 = vsel %vm123, %v1260, -1e+30
    %v1280 = vsel %vm124, %v1263, -1e+30
    %1281 = vmax.xlane.f32.xlu0 %v1265
    %v1282 = vpop.xlane.xlu0 %1281
    %1283 = vmax.xlane.f32.xlu0 %v1266
    %v1284 = vpop.xlane.xlu0 %1283
    %1285 = vmax.xlane.f32.xlu0 %v1267
    %v1286 = vpop.xlane.xlu0 %1285
    %1287 = vmax.xlane.f32.xlu0 %v1268
    %v1288 = vpop.xlane.xlu0 %1287
    %1289 = vmax.xlane.f32.xlu0 %v1269
    %v1290 = vpop.xlane.xlu0 %1289
    %1291 = vmax.xlane.f32.xlu0 %v1270
    %v1292 = vpop.xlane.xlu0 %1291
    %1293 = vmax.xlane.f32.xlu0 %v1271
    %v1294 = vpop.xlane.xlu0 %1293
    %1295 = vmax.xlane.f32.xlu0 %v1272
    %v1296 = vpop.xlane.xlu0 %1295
    %1297 = vmax.xlane.f32.xlu0 %v1273
    %v1298 = vpop.xlane.xlu0 %1297
    %1299 = vmax.xlane.f32.xlu0 %v1274
    %v1300 = vpop.xlane.xlu0 %1299
    %1301 = vmax.xlane.f32.xlu0 %v1275
    %v1302 = vpop.xlane.xlu0 %1301
    %1303 = vmax.xlane.f32.xlu0 %v1276
    %v1304 = vpop.xlane.xlu0 %1303
    %1305 = vmax.xlane.f32.xlu0 %v1277
    %v1306 = vpop.xlane.xlu0 %1305
    %1307 = vmax.xlane.f32.xlu0 %v1278
    %v1308 = vpop.xlane.xlu0 %1307
    %1309 = vmax.xlane.f32.xlu0 %v1279
    %v1310 = vpop.xlane.xlu0 %1309
    %1311 = vmax.xlane.f32.xlu0 %v1280
    %v1312 = vpop.xlane.xlu0 %1311
    %v1313 = vsub.f32 %v1265, %v1282
    %v1314 = vsub.f32 %v1266, %v1284
    %v1315 = vsub.f32 %v1267, %v1286
    %v1316 = vsub.f32 %v1268, %v1288
    %v1317 = vsub.f32 %v1269, %v1290
    %v1318 = vsub.f32 %v1270, %v1292
    %v1319 = vsub.f32 %v1271, %v1294
    %v1320 = vsub.f32 %v1272, %v1296
    %v1321 = vsub.f32 %v1273, %v1298
    %v1322 = vsub.f32 %v1274, %v1300
    %v1323 = vsub.f32 %v1275, %v1302
    %v1324 = vsub.f32 %v1276, %v1304
    %v1325 = vsub.f32 %v1277, %v1306
    %v1326 = vsub.f32 %v1278, %v1308
    %v1327 = vsub.f32 %v1279, %v1310
    %v1328 = vsub.f32 %v1280, %v1312
    %v1329 = vmul.f32 %v1313, 1.442695
    %v1330 = vpow.pop %v1329
    %v1331 = vmul.f32 %v1314, 1.442695
    %v1332 = vpow.pop %v1331
    %v1333 = vmul.f32 %v1315, 1.442695
    %v1334 = vpow.pop %v1333
    %v1335 = vmul.f32 %v1316, 1.442695
    %v1336 = vpow.pop %v1335
    %v1337 = vmul.f32 %v1317, 1.442695
    %v1338 = vpow.pop %v1337
    %v1339 = vmul.f32 %v1318, 1.442695
    %v1340 = vpow.pop %v1339
    %v1341 = vmul.f32 %v1319, 1.442695
    %v1342 = vpow.pop %v1341
    %v1343 = vmul.f32 %v1320, 1.442695
    %v1344 = vpow.pop %v1343
    %v1345 = vmul.f32 %v1321, 1.442695
    %v1346 = vpow.pop %v1345
    %v1347 = vmul.f32 %v1322, 1.442695
    %v1348 = vpow.pop %v1347
    %v1349 = vmul.f32 %v1323, 1.442695
    %v1350 = vpow.pop %v1349
    %v1351 = vmul.f32 %v1324, 1.442695
    %v1352 = vpow.pop %v1351
    %v1353 = vmul.f32 %v1325, 1.442695
    %v1354 = vpow.pop %v1353
    %v1355 = vmul.f32 %v1326, 1.442695
    %v1356 = vpow.pop %v1355
    %v1357 = vmul.f32 %v1327, 1.442695
    %v1358 = vpow.pop %v1357
    %v1359 = vmul.f32 %v1328, 1.442695
    %v1360 = vpow.pop %v1359
    %1361 = vadd.xlane.f32.xlu0 %v1330
    %v1362 = vpop.xlane.xlu0 %1361
    %1363 = vadd.xlane.f32.xlu0 %v1332
    %v1364 = vpop.xlane.xlu0 %1363
    %1365 = vadd.xlane.f32.xlu0 %v1334
    %v1366 = vpop.xlane.xlu0 %1365
    %1367 = vadd.xlane.f32.xlu0 %v1336
    %v1368 = vpop.xlane.xlu0 %1367
    %1369 = vadd.xlane.f32.xlu0 %v1338
    %v1370 = vpop.xlane.xlu0 %1369
    %1371 = vadd.xlane.f32.xlu0 %v1340
    %v1372 = vpop.xlane.xlu0 %1371
    %1373 = vadd.xlane.f32.xlu0 %v1342
    %v1374 = vpop.xlane.xlu0 %1373
    %1375 = vadd.xlane.f32.xlu0 %v1344
    %v1376 = vpop.xlane.xlu0 %1375
    %1377 = vadd.xlane.f32.xlu0 %v1346
    %v1378 = vpop.xlane.xlu0 %1377
    %1379 = vadd.xlane.f32.xlu0 %v1348
    %v1380 = vpop.xlane.xlu0 %1379
    %1381 = vadd.xlane.f32.xlu0 %v1350
    %v1382 = vpop.xlane.xlu0 %1381
    %1383 = vadd.xlane.f32.xlu0 %v1352
    %v1384 = vpop.xlane.xlu0 %1383
    %1385 = vadd.xlane.f32.xlu0 %v1354
    %v1386 = vpop.xlane.xlu0 %1385
    %1387 = vadd.xlane.f32.xlu0 %v1356
    %v1388 = vpop.xlane.xlu0 %1387
    %1389 = vadd.xlane.f32.xlu0 %v1358
    %v1390 = vpop.xlane.xlu0 %1389
    %1391 = vadd.xlane.f32.xlu0 %v1360
    %v1392 = vpop.xlane.xlu0 %1391
    %v1393 = vrcp.pop %v1362
    %v1394 = vmul.f32 %v1362, %v1393
    %v1395 = vsub.f32 1.0, %v1394
    %v1396 = vmul.f32 %v1393, %v1395
    %v1397 = vadd.f32 %v1393, %v1396
    %vm1398 = vweird.f32 %v1362
    %vm1399 = vweird.f32 %v1393
    %vm1400 = vmor %vm1398, %vm1399
    %v1401 = vsel %vm1400, %v1393, %v1397
    %v1402 = vand.u32 2147483647, %v1362
    %vm1403 = vcmp.eq.f32.partialorder %v1402, 8.507059e+37
    %v1404 = vand.u32 %v1362, 2147483648
    %v1405 = vor.u32 1.1754944e-38, %v1404
    %v1406 = vsel %vm1403, %v1405, %v1401
    %v1407 = vrcp.pop %v1364
    %v1408 = vmul.f32 %v1364, %v1407
    %v1409 = vsub.f32 1.0, %v1408
    %v1410 = vmul.f32 %v1407, %v1409
    %v1411 = vadd.f32 %v1407, %v1410
    %vm1412 = vweird.f32 %v1364
    %vm1413 = vweird.f32 %v1407
    %vm1414 = vmor %vm1412, %vm1413
    %v1415 = vsel %vm1414, %v1407, %v1411
    %v1416 = vand.u32 2147483647, %v1364
    %vm1417 = vcmp.eq.f32.partialorder %v1416, 8.507059e+37
    %v1418 = vand.u32 %v1364, 2147483648
    %v1419 = vor.u32 1.1754944e-38, %v1418
    %v1420 = vsel %vm1417, %v1419, %v1415
    %v1421 = vrcp.pop %v1366
    %v1422 = vmul.f32 %v1366, %v1421
    %v1423 = vsub.f32 1.0, %v1422
    %v1424 = vmul.f32 %v1421, %v1423
    %v1425 = vadd.f32 %v1421, %v1424
    %vm1426 = vweird.f32 %v1366
    %vm1427 = vweird.f32 %v1421
    %vm1428 = vmor %vm1426, %vm1427
    %v1429 = vsel %vm1428, %v1421, %v1425
    %v1430 = vand.u32 2147483647, %v1366
    %vm1431 = vcmp.eq.f32.partialorder %v1430, 8.507059e+37
    %v1432 = vand.u32 %v1366, 2147483648
    %v1433 = vor.u32 1.1754944e-38, %v1432
    %v1434 = vsel %vm1431, %v1433, %v1429
    %v1435 = vrcp.pop %v1368
    %v1436 = vmul.f32 %v1368, %v1435
    %v1437 = vsub.f32 1.0, %v1436
    %v1438 = vmul.f32 %v1435, %v1437
    %v1439 = vadd.f32 %v1435, %v1438
    %vm1440 = vweird.f32 %v1368
    %vm1441 = vweird.f32 %v1435
    %vm1442 = vmor %vm1440, %vm1441
    %v1443 = vsel %vm1442, %v1435, %v1439
    %v1444 = vand.u32 2147483647, %v1368
    %vm1445 = vcmp.eq.f32.partialorder %v1444, 8.507059e+37
    %v1446 = vand.u32 %v1368, 2147483648
    %v1447 = vor.u32 1.1754944e-38, %v1446
    %v1448 = vsel %vm1445, %v1447, %v1443
    %v1449 = vrcp.pop %v1370
    %v1450 = vmul.f32 %v1370, %v1449
    %v1451 = vsub.f32 1.0, %v1450
    %v1452 = vmul.f32 %v1449, %v1451
    %v1453 = vadd.f32 %v1449, %v1452
    %vm1454 = vweird.f32 %v1370
    %vm1455 = vweird.f32 %v1449
    %vm1456 = vmor %vm1454, %vm1455
    %v1457 = vsel %vm1456, %v1449, %v1453
    %v1458 = vand.u32 2147483647, %v1370
    %vm1459 = vcmp.eq.f32.partialorder %v1458, 8.507059e+37
    %v1460 = vand.u32 %v1370, 2147483648
    %v1461 = vor.u32 1.1754944e-38, %v1460
    %v1462 = vsel %vm1459, %v1461, %v1457
    %v1463 = vrcp.pop %v1372
    %v1464 = vmul.f32 %v1372, %v1463
    %v1465 = vsub.f32 1.0, %v1464
    %v1466 = vmul.f32 %v1463, %v1465
    %v1467 = vadd.f32 %v1463, %v1466
    %vm1468 = vweird.f32 %v1372
    %vm1469 = vweird.f32 %v1463
    %vm1470 = vmor %vm1468, %vm1469
    %v1471 = vsel %vm1470, %v1463, %v1467
    %v1472 = vand.u32 2147483647, %v1372
    %vm1473 = vcmp.eq.f32.partialorder %v1472, 8.507059e+37
    %v1474 = vand.u32 %v1372, 2147483648
    %v1475 = vor.u32 1.1754944e-38, %v1474
    %v1476 = vsel %vm1473, %v1475, %v1471
    %v1477 = vrcp.pop %v1374
    %v1478 = vmul.f32 %v1374, %v1477
    %v1479 = vsub.f32 1.0, %v1478
    %v1480 = vmul.f32 %v1477, %v1479
    %v1481 = vadd.f32 %v1477, %v1480
    %vm1482 = vweird.f32 %v1374
    %vm1483 = vweird.f32 %v1477
    %vm1484 = vmor %vm1482, %vm1483
    %v1485 = vsel %vm1484, %v1477, %v1481
    %v1486 = vand.u32 2147483647, %v1374
    %vm1487 = vcmp.eq.f32.partialorder %v1486, 8.507059e+37
    %v1488 = vand.u32 %v1374, 2147483648
    %v1489 = vor.u32 1.1754944e-38, %v1488
    %v1490 = vsel %vm1487, %v1489, %v1485
    %v1491 = vrcp.pop %v1376
    %v1492 = vmul.f32 %v1376, %v1491
    %v1493 = vsub.f32 1.0, %v1492
    %v1494 = vmul.f32 %v1491, %v1493
    %v1495 = vadd.f32 %v1491, %v1494
    %vm1496 = vweird.f32 %v1376
    %vm1497 = vweird.f32 %v1491
    %vm1498 = vmor %vm1496, %vm1497
    %v1499 = vsel %vm1498, %v1491, %v1495
    %v1500 = vand.u32 2147483647, %v1376
    %vm1501 = vcmp.eq.f32.partialorder %v1500, 8.507059e+37
    %v1502 = vand.u32 %v1376, 2147483648
    %v1503 = vor.u32 1.1754944e-38, %v1502
    %v1504 = vsel %vm1501, %v1503, %v1499
    %v1505 = vrcp.pop %v1378
    %v1506 = vmul.f32 %v1378, %v1505
    %v1507 = vsub.f32 1.0, %v1506
    %v1508 = vmul.f32 %v1505, %v1507
    %v1509 = vadd.f32 %v1505, %v1508
    %vm1510 = vweird.f32 %v1378
    %vm1511 = vweird.f32 %v1505
    %vm1512 = vmor %vm1510, %vm1511
    %v1513 = vsel %vm1512, %v1505, %v1509
    %v1514 = vand.u32 2147483647, %v1378
    %vm1515 = vcmp.eq.f32.partialorder %v1514, 8.507059e+37
    %v1516 = vand.u32 %v1378, 2147483648
    %v1517 = vor.u32 1.1754944e-38, %v1516
    %v1518 = vsel %vm1515, %v1517, %v1513
    %v1519 = vrcp.pop %v1380
    %v1520 = vmul.f32 %v1380, %v1519
    %v1521 = vsub.f32 1.0, %v1520
    %v1522 = vmul.f32 %v1519, %v1521
    %v1523 = vadd.f32 %v1519, %v1522
    %vm1524 = vweird.f32 %v1380
    %vm1525 = vweird.f32 %v1519
    %vm1526 = vmor %vm1524, %vm1525
    %v1527 = vsel %vm1526, %v1519, %v1523
    %v1528 = vand.u32 2147483647, %v1380
    %vm1529 = vcmp.eq.f32.partialorder %v1528, 8.507059e+37
    %v1530 = vand.u32 %v1380, 2147483648
    %v1531 = vor.u32 1.1754944e-38, %v1530
    %v1532 = vsel %vm1529, %v1531, %v1527
    %v1533 = vrcp.pop %v1382
    %v1534 = vmul.f32 %v1382, %v1533
    %v1535 = vsub.f32 1.0, %v1534
    %v1536 = vmul.f32 %v1533, %v1535
    %v1537 = vadd.f32 %v1533, %v1536
    %vm1538 = vweird.f32 %v1382
    %vm1539 = vweird.f32 %v1533
    %vm1540 = vmor %vm1538, %vm1539
    %v1541 = vsel %vm1540, %v1533, %v1537
    %v1542 = vand.u32 2147483647, %v1382
    %vm1543 = vcmp.eq.f32.partialorder %v1542, 8.507059e+37
    %v1544 = vand.u32 %v1382, 2147483648
    %v1545 = vor.u32 1.1754944e-38, %v1544
    %v1546 = vsel %vm1543, %v1545, %v1541
    %v1547 = vrcp.pop %v1384
    %v1548 = vmul.f32 %v1384, %v1547
    %v1549 = vsub.f32 1.0, %v1548
    %v1550 = vmul.f32 %v1547, %v1549
    %v1551 = vadd.f32 %v1547, %v1550
    %vm1552 = vweird.f32 %v1384
    %vm1553 = vweird.f32 %v1547
    %vm1554 = vmor %vm1552, %vm1553
    %v1555 = vsel %vm1554, %v1547, %v1551
    %v1556 = vand.u32 2147483647, %v1384
    %vm1557 = vcmp.eq.f32.partialorder %v1556, 8.507059e+37
    %v1558 = vand.u32 %v1384, 2147483648
    %v1559 = vor.u32 1.1754944e-38, %v1558
    %v1560 = vsel %vm1557, %v1559, %v1555
    %v1561 = vrcp.pop %v1386
    %v1562 = vmul.f32 %v1386, %v1561
    %v1563 = vsub.f32 1.0, %v1562
    %v1564 = vmul.f32 %v1561, %v1563
    %v1565 = vadd.f32 %v1561, %v1564
    %vm1566 = vweird.f32 %v1386
    %vm1567 = vweird.f32 %v1561
    %vm1568 = vmor %vm1566, %vm1567
    %v1569 = vsel %vm1568, %v1561, %v1565
    %v1570 = vand.u32 2147483647, %v1386
    %vm1571 = vcmp.eq.f32.partialorder %v1570, 8.507059e+37
    %v1572 = vand.u32 %v1386, 2147483648
    %v1573 = vor.u32 1.1754944e-38, %v1572
    %v1574 = vsel %vm1571, %v1573, %v1569
    %v1575 = vrcp.pop %v1388
    %v1576 = vmul.f32 %v1388, %v1575
    %v1577 = vsub.f32 1.0, %v1576
    %v1578 = vmul.f32 %v1575, %v1577
    %v1579 = vadd.f32 %v1575, %v1578
    %vm1580 = vweird.f32 %v1388
    %vm1581 = vweird.f32 %v1575
    %vm1582 = vmor %vm1580, %vm1581
    %v1583 = vsel %vm1582, %v1575, %v1579
    %v1584 = vand.u32 2147483647, %v1388
    %vm1585 = vcmp.eq.f32.partialorder %v1584, 8.507059e+37
    %v1586 = vand.u32 %v1388, 2147483648
    %v1587 = vor.u32 1.1754944e-38, %v1586
    %v1588 = vsel %vm1585, %v1587, %v1583
    %v1589 = vrcp.pop %v1390
    %v1590 = vmul.f32 %v1390, %v1589
    %v1591 = vsub.f32 1.0, %v1590
    %v1592 = vmul.f32 %v1589, %v1591
    %v1593 = vadd.f32 %v1589, %v1592
    %vm1594 = vweird.f32 %v1390
    %vm1595 = vweird.f32 %v1589
    %vm1596 = vmor %vm1594, %vm1595
    %v1597 = vsel %vm1596, %v1589, %v1593
    %v1598 = vand.u32 2147483647, %v1390
    %vm1599 = vcmp.eq.f32.partialorder %v1598, 8.507059e+37
    %v1600 = vand.u32 %v1390, 2147483648
    %v1601 = vor.u32 1.1754944e-38, %v1600
    %v1602 = vsel %vm1599, %v1601, %v1597
    %v1603 = vrcp.pop %v1392
    %v1604 = vmul.f32 %v1392, %v1603
    %v1605 = vsub.f32 1.0, %v1604
    %v1606 = vmul.f32 %v1603, %v1605
    %v1607 = vadd.f32 %v1603, %v1606
    %vm1608 = vweird.f32 %v1392
    %vm1609 = vweird.f32 %v1603
    %vm1610 = vmor %vm1608, %vm1609
    %v1611 = vsel %vm1610, %v1603, %v1607
    %v1612 = vand.u32 2147483647, %v1392
    %vm1613 = vcmp.eq.f32.partialorder %v1612, 8.507059e+37
    %v1614 = vand.u32 %v1392, 2147483648
    %v1615 = vor.u32 1.1754944e-38, %v1614
    %v1616 = vsel %vm1613, %v1615, %v1611
    %v1617 = vmul.f32 %v1330, %v1406
    %v1618 = vmul.f32 %v1332, %v1420
    %v1619 = vmul.f32 %v1334, %v1434
    %v1620 = vmul.f32 %v1336, %v1448
    %v1621 = vmul.f32 %v1338, %v1462
    %v1622 = vmul.f32 %v1340, %v1476
    %v1623 = vmul.f32 %v1342, %v1490
    %v1624 = vmul.f32 %v1344, %v1504
    %v1625 = vmul.f32 %v1346, %v1518
    %v1626 = vmul.f32 %v1348, %v1532
    %v1627 = vmul.f32 %v1350, %v1546
    %v1628 = vmul.f32 %v1352, %v1560
    %v1629 = vmul.f32 %v1354, %v1574
    %v1630 = vmul.f32 %v1356, %v1588
    %v1631 = vmul.f32 %v1358, %v1602
    %v1632 = vmul.f32 %v1360, %v1616
    %1633 = vmatpush.msra.mxu0 %v1103
    %1634 = vmatpush.msra.mxu0 %v1102
    %1635 = vmatpush.msra.mxu0 %v1101
    %1636 = vmatpush.msra.mxu0 %v1100
    %1637 = vmatpush.msra.mxu0 %v1099
    %1638 = vmatpush.msra.mxu0 %v1098
    %1639 = vmatpush.msra.mxu0 %v1097
    %1640 = vmatpush.msra.mxu0 %v1096
    %1641 = vmatpush.msra.mxu0 %v1095
    %1642 = vmatpush.msra.mxu0 %v1094
    %1643 = vmatpush.msra.mxu0 %v1093
    %1644 = vmatpush.msra.mxu0 %v1092
    %1645 = vmatpush.msra.mxu0 %v1091
    %1646 = vmatpush.msra.mxu0 %v1090
    %1647 = vmatpush.msra.mxu0 %v1089
    %1648 = vmatpush.msra.mxu0 %v1088
    %1649 = vmatmul.f32.gmra.mxu0 %v1617
    %v1650 = vpop.f32.mrf.mxu0
    %v1651 = vadd.f32 0.0, %v1650
    %1652 = vmatmul.f32.gmra.mxu0 %v1618
    %v1653 = vpop.f32.mrf.mxu0
    %v1654 = vadd.f32 0.0, %v1653
    %1655 = vmatmul.f32.gmra.mxu0 %v1619
    %v1656 = vpop.f32.mrf.mxu0
    %v1657 = vadd.f32 0.0, %v1656
    %1658 = vmatmul.f32.gmra.mxu0 %v1620
    %v1659 = vpop.f32.mrf.mxu0
    %v1660 = vadd.f32 0.0, %v1659
    %1661 = vmatmul.f32.gmra.mxu0 %v1621
    %v1662 = vpop.f32.mrf.mxu0
    %v1663 = vadd.f32 0.0, %v1662
    %1664 = vmatmul.f32.gmra.mxu0 %v1622
    %v1665 = vpop.f32.mrf.mxu0
    %v1666 = vadd.f32 0.0, %v1665
    %1667 = vmatmul.f32.gmra.mxu0 %v1623
    %v1668 = vpop.f32.mrf.mxu0
    %v1669 = vadd.f32 0.0, %v1668
    %1670 = vmatmul.f32.gmra.mxu0 %v1624
    %v1671 = vpop.f32.mrf.mxu0
    %v1672 = vadd.f32 0.0, %v1671
    %1673 = vmatmul.f32.gmra.mxu0 %v1625
    %v1674 = vpop.f32.mrf.mxu0
    %v1675 = vadd.f32 0.0, %v1674
    %1676 = vmatmul.f32.gmra.mxu0 %v1626
    %v1677 = vpop.f32.mrf.mxu0
    %v1678 = vadd.f32 0.0, %v1677
    %1679 = vmatmul.f32.gmra.mxu0 %v1627
    %v1680 = vpop.f32.mrf.mxu0
    %v1681 = vadd.f32 0.0, %v1680
    %1682 = vmatmul.f32.gmra.mxu0 %v1628
    %v1683 = vpop.f32.mrf.mxu0
    %v1684 = vadd.f32 0.0, %v1683
    %1685 = vmatmul.f32.gmra.mxu0 %v1629
    %v1686 = vpop.f32.mrf.mxu0
    %v1687 = vadd.f32 0.0, %v1686
    %1688 = vmatmul.f32.gmra.mxu0 %v1630
    %v1689 = vpop.f32.mrf.mxu0
    %v1690 = vadd.f32 0.0, %v1689
    %1691 = vmatmul.f32.gmra.mxu0 %v1631
    %v1692 = vpop.f32.mrf.mxu0
    %v1693 = vadd.f32 0.0, %v1692
    %1694 = vmatmul.f32.gmra.mxu0 %v1632
    %v1695 = vpop.f32.mrf.mxu0
    %v1696 = vadd.f32 0.0, %v1695
    %1697 = vdwg.mxu0
    %v1699 = vsel %vm182, %v1651, 0
    %v1702 = vsel %vm182, %v1654, 0
    %v1705 = vsel %vm182, %v1657, 0
    %v1708 = vsel %vm182, %v1660, 0
    %v1711 = vsel %vm182, %v1663, 0
    %v1714 = vsel %vm182, %v1666, 0
    %v1717 = vsel %vm182, %v1669, 0
    %v1720 = vsel %vm182, %v1672, 0
    %v1723 = vsel %vm182, %v1675, 0
    %v1726 = vsel %vm182, %v1678, 0
    %v1729 = vsel %vm182, %v1681, 0
    %v1732 = vsel %vm182, %v1684, 0
    %v1735 = vsel %vm182, %v1687, 0
    %v1738 = vsel %vm182, %v1690, 0
    %v1741 = vsel %vm182, %v1693, 0
    %v1744 = vsel %vm182, %v1696, 0
    %1746 = vmatpush.msra.mxu0 0.0
    %1747 = vmatpush.msra.mxu0 0.0
    %1748 = vmatpush.msra.mxu0 0.0
    %1749 = vmatpush.msra.mxu0 0.0
    %1750 = vmatpush.msra.mxu0 0.0
    %1751 = vmatpush.msra.mxu0 0.0
    %1752 = vmatpush.msra.mxu0 0.0
    %1753 = vmatpush.msra.mxu0 0.0
    %1754 = vmatpush.msra.mxu0 0.0
    %1755 = vmatpush.msra.mxu0 0.0
    %1756 = vmatpush.msra.mxu0 0.0
    %1757 = vmatpush.msra.mxu0 0.0
    %1758 = vmatpush.msra.mxu0 %v148
    %1759 = vmatpush.msra.mxu0 %v147
    %1760 = vmatpush.msra.mxu0 %v146
    %1761 = vmatpush.msra.mxu0 %v145
    %1762 = vmatmul.f32.gmra.mxu0 %v1699
    %v1763 = vpop.f32.mrf.mxu0
    %v1764 = vadd.f32 0.0, %v1763
    %1765 = vmatmul.f32.gmra.mxu0 %v1702
    %v1766 = vpop.f32.mrf.mxu0
    %v1767 = vadd.f32 0.0, %v1766
    %1768 = vmatmul.f32.gmra.mxu0 %v1705
    %v1769 = vpop.f32.mrf.mxu0
    %v1770 = vadd.f32 0.0, %v1769
    %1771 = vmatmul.f32.gmra.mxu0 %v1708
    %v1772 = vpop.f32.mrf.mxu0
    %v1773 = vadd.f32 0.0, %v1772
    %1774 = vmatmul.f32.gmra.mxu0 %v1711
    %v1775 = vpop.f32.mrf.mxu0
    %v1776 = vadd.f32 0.0, %v1775
    %1777 = vmatmul.f32.gmra.mxu0 %v1714
    %v1778 = vpop.f32.mrf.mxu0
    %v1779 = vadd.f32 0.0, %v1778
    %1780 = vmatmul.f32.gmra.mxu0 %v1717
    %v1781 = vpop.f32.mrf.mxu0
    %v1782 = vadd.f32 0.0, %v1781
    %1783 = vmatmul.f32.gmra.mxu0 %v1720
    %v1784 = vpop.f32.mrf.mxu0
    %v1785 = vadd.f32 0.0, %v1784
    %1786 = vmatmul.f32.gmra.mxu0 %v1723
    %v1787 = vpop.f32.mrf.mxu0
    %v1788 = vadd.f32 0.0, %v1787
    %1789 = vmatmul.f32.gmra.mxu0 %v1726
    %v1790 = vpop.f32.mrf.mxu0
    %v1791 = vadd.f32 0.0, %v1790
    %1792 = vmatmul.f32.gmra.mxu0 %v1729
    %v1793 = vpop.f32.mrf.mxu0
    %v1794 = vadd.f32 0.0, %v1793
    %1795 = vmatmul.f32.gmra.mxu0 %v1732
    %v1796 = vpop.f32.mrf.mxu0
    %v1797 = vadd.f32 0.0, %v1796
    %1798 = vmatmul.f32.gmra.mxu0 %v1735
    %v1799 = vpop.f32.mrf.mxu0
    %v1800 = vadd.f32 0.0, %v1799
    %1801 = vmatmul.f32.gmra.mxu0 %v1738
    %v1802 = vpop.f32.mrf.mxu0
    %v1803 = vadd.f32 0.0, %v1802
    %1804 = vmatmul.f32.gmra.mxu0 %v1741
    %v1805 = vpop.f32.mrf.mxu0
    %v1806 = vadd.f32 0.0, %v1805
    %1807 = vmatmul.f32.gmra.mxu0 %v1744
    %v1808 = vpop.f32.mrf.mxu0
    %v1809 = vadd.f32 0.0, %v1808
    %1810 = vdwg.mxu0
    %1811 = vmatpush.msra.mxu0 0.0
    %1812 = vmatpush.msra.mxu0 0.0
    %1813 = vmatpush.msra.mxu0 0.0
    %1814 = vmatpush.msra.mxu0 0.0
    %1815 = vmatpush.msra.mxu0 0.0
    %1816 = vmatpush.msra.mxu0 0.0
    %1817 = vmatpush.msra.mxu0 0.0
    %1818 = vmatpush.msra.mxu0 0.0
    %1819 = vmatpush.msra.mxu0 0.0
    %1820 = vmatpush.msra.mxu0 0.0
    %1821 = vmatpush.msra.mxu0 0.0
    %1822 = vmatpush.msra.mxu0 0.0
    %1823 = vmatpush.msra.mxu0 %v144
    %1824 = vmatpush.msra.mxu0 %v143
    %1825 = vmatpush.msra.mxu0 %v142
    %1826 = vmatpush.msra.mxu0 %v141
    %1827 = vmatmul.f32.gmra.mxu0 %v1105
    %v1828 = vpop.f32.mrf.mxu0
    %v1829 = vadd.f32 %v1764, %v1828
    %1830 = vmatmul.f32.gmra.mxu0 %v1108
    %v1831 = vpop.f32.mrf.mxu0
    %v1832 = vadd.f32 %v1767, %v1831
    %1833 = vmatmul.f32.gmra.mxu0 %v1111
    %v1834 = vpop.f32.mrf.mxu0
    %v1835 = vadd.f32 %v1770, %v1834
    %1836 = vmatmul.f32.gmra.mxu0 %v1114
    %v1837 = vpop.f32.mrf.mxu0
    %v1838 = vadd.f32 %v1773, %v1837
    %1839 = vmatmul.f32.gmra.mxu0 %v1117
    %v1840 = vpop.f32.mrf.mxu0
    %v1841 = vadd.f32 %v1776, %v1840
    %1842 = vmatmul.f32.gmra.mxu0 %v1120
    %v1843 = vpop.f32.mrf.mxu0
    %v1844 = vadd.f32 %v1779, %v1843
    %1845 = vmatmul.f32.gmra.mxu0 %v1123
    %v1846 = vpop.f32.mrf.mxu0
    %v1847 = vadd.f32 %v1782, %v1846
    %1848 = vmatmul.f32.gmra.mxu0 %v1126
    %v1849 = vpop.f32.mrf.mxu0
    %v1850 = vadd.f32 %v1785, %v1849
    %1851 = vmatmul.f32.gmra.mxu0 %v1129
    %v1852 = vpop.f32.mrf.mxu0
    %v1853 = vadd.f32 %v1788, %v1852
    %1854 = vmatmul.f32.gmra.mxu0 %v1132
    %v1855 = vpop.f32.mrf.mxu0
    %v1856 = vadd.f32 %v1791, %v1855
    %1857 = vmatmul.f32.gmra.mxu0 %v1135
    %v1858 = vpop.f32.mrf.mxu0
    %v1859 = vadd.f32 %v1794, %v1858
    %1860 = vmatmul.f32.gmra.mxu0 %v1138
    %v1861 = vpop.f32.mrf.mxu0
    %v1862 = vadd.f32 %v1797, %v1861
    %1863 = vmatmul.f32.gmra.mxu0 %v1141
    %v1864 = vpop.f32.mrf.mxu0
    %v1865 = vadd.f32 %v1800, %v1864
    %1866 = vmatmul.f32.gmra.mxu0 %v1144
    %v1867 = vpop.f32.mrf.mxu0
    %v1868 = vadd.f32 %v1803, %v1867
    %1869 = vmatmul.f32.gmra.mxu0 %v1147
    %v1870 = vpop.f32.mrf.mxu0
    %v1871 = vadd.f32 %v1806, %v1870
    %1872 = vmatmul.f32.gmra.mxu0 %v1150
    %v1873 = vpop.f32.mrf.mxu0
    %v1874 = vadd.f32 %v1809, %v1873
    %1875 = vdwg.mxu0
    %v1876 = vadd.f32 %v1829, %v956
    %v1877 = vadd.f32 %v1832, %v956
    %v1878 = vadd.f32 %v1835, %v956
    %v1879 = vadd.f32 %v1838, %v956
    %v1880 = vadd.f32 %v1841, %v956
    %v1881 = vadd.f32 %v1844, %v956
    %v1882 = vadd.f32 %v1847, %v956
    %v1883 = vadd.f32 %v1850, %v956
    %v1884 = vadd.f32 %v1853, %v956
    %v1885 = vadd.f32 %v1856, %v956
    %v1886 = vadd.f32 %v1859, %v956
    %v1887 = vadd.f32 %v1862, %v956
    %v1888 = vadd.f32 %v1865, %v956
    %v1889 = vadd.f32 %v1868, %v956
    %v1890 = vadd.f32 %v1871, %v956
    %v1891 = vadd.f32 %v1874, %v956
    %v1892 = vtanh.pop %v1876
    %v1893 = vtanh.pop %v1877
    %v1894 = vtanh.pop %v1878
    %v1895 = vtanh.pop %v1879
    %v1896 = vtanh.pop %v1880
    %v1897 = vtanh.pop %v1881
    %v1898 = vtanh.pop %v1882
    %v1899 = vtanh.pop %v1883
    %v1900 = vtanh.pop %v1884
    %v1901 = vtanh.pop %v1885
    %v1902 = vtanh.pop %v1886
    %v1903 = vtanh.pop %v1887
    %v1904 = vtanh.pop %v1888
    %v1905 = vtanh.pop %v1889
    %v1906 = vtanh.pop %v1890
    %v1907 = vtanh.pop %v1891
    %v1908 = vsel %vm1006, %v1071, %v1892
    %v1909 = vsel %vm1007, %v1072, %v1893
    %v1910 = vsel %vm1008, %v1073, %v1894
    %v1911 = vsel %vm1009, %v1074, %v1895
    %v1912 = vsel %vm1010, %v1075, %v1896
    %v1913 = vsel %vm1011, %v1076, %v1897
    %v1914 = vsel %vm1012, %v1077, %v1898
    %v1915 = vsel %vm1013, %v1078, %v1899
    %v1916 = vsel %vm1014, %v1079, %v1900
    %v1917 = vsel %vm1015, %v1080, %v1901
    %v1918 = vsel %vm1016, %v1081, %v1902
    %v1919 = vsel %vm1017, %v1082, %v1903
    %v1920 = vsel %vm1018, %v1083, %v1904
    %v1921 = vsel %vm1019, %v1084, %v1905
    %v1922 = vsel %vm1020, %v1085, %v1906
    %v1923 = vsel %vm1021, %v1086, %v1907
    %s1924 = scalar_lea.vmem %s5, 128
    %1925 = vst.msk [vmem:[%s1924] sm:$0xff] %vm182, %v1908
    %1926 = vst.msk [vmem:[%s1924 + $0x8] sm:$0xff] %vm182, %v1909
    %1927 = vst.msk [vmem:[%s1924 + $0x10] sm:$0xff] %vm182, %v1910
    %1928 = vst.msk [vmem:[%s1924 + $0x18] sm:$0xff] %vm182, %v1911
    %1929 = vst.msk [vmem:[%s1924 + $0x20] sm:$0xff] %vm182, %v1912
    %1930 = vst.msk [vmem:[%s1924 + $0x28] sm:$0xff] %vm182, %v1913
    %1931 = vst.msk [vmem:[%s1924 + $0x30] sm:$0xff] %vm182, %v1914
    %1932 = vst.msk [vmem:[%s1924 + $0x38] sm:$0xff] %vm182, %v1915
    %1933 = vst.msk [vmem:[%s1924 + $0x40] sm:$0xff] %vm182, %v1916
    %1934 = vst.msk [vmem:[%s1924 + $0x48] sm:$0xff] %vm182, %v1917
    %1935 = vst.msk [vmem:[%s1924 + $0x50] sm:$0xff] %vm182, %v1918
    %1936 = vst.msk [vmem:[%s1924 + $0x58] sm:$0xff] %vm182, %v1919
    %1937 = vst.msk [vmem:[%s1924 + $0x60] sm:$0xff] %vm182, %v1920
    %1938 = vst.msk [vmem:[%s1924 + $0x68] sm:$0xff] %vm182, %v1921
    %1939 = vst.msk [vmem:[%s1924 + $0x70] sm:$0xff] %vm182, %v1922
    %1940 = vst.msk [vmem:[%s1924 + $0x78] sm:$0xff] %vm182, %v1923
    %s1941 = scalar_lea.vmem [#allocation2], 128
    %1942 = vst [vmem:[%s1941] sm:$0xff] %v1617
    %1943 = vst [vmem:[%s1941 + $0x8] sm:$0xff] %v1618
    %1944 = vst [vmem:[%s1941 + $0x10] sm:$0xff] %v1619
    %1945 = vst [vmem:[%s1941 + $0x18] sm:$0xff] %v1620
    %1946 = vst [vmem:[%s1941 + $0x20] sm:$0xff] %v1621
    %1947 = vst [vmem:[%s1941 + $0x28] sm:$0xff] %v1622
    %1948 = vst [vmem:[%s1941 + $0x30] sm:$0xff] %v1623
    %1949 = vst [vmem:[%s1941 + $0x38] sm:$0xff] %v1624
    %1950 = vst [vmem:[%s1941 + $0x40] sm:$0xff] %v1625
    %1951 = vst [vmem:[%s1941 + $0x48] sm:$0xff] %v1626
    %1952 = vst [vmem:[%s1941 + $0x50] sm:$0xff] %v1627
    %1953 = vst [vmem:[%s1941 + $0x58] sm:$0xff] %v1628
    %1954 = vst [vmem:[%s1941 + $0x60] sm:$0xff] %v1629
    %1955 = vst [vmem:[%s1941 + $0x68] sm:$0xff] %v1630
    %1956 = vst [vmem:[%s1941 + $0x70] sm:$0xff] %v1631
    %1957 = vst [vmem:[%s1941 + $0x78] sm:$0xff] %v1632
    // Predicated region
    $region22: #{tpu_custom_call.1} parent=1 // pred_check
      _
    $region23: #{tpu_custom_call.1} parent=1 // pred_check_branch
      %1959 = sbr.rel (0) target = $region25
    $region24: #{tpu_custom_call.1} parent=1 // pred_region
      _
    $region25: #{tpu_custom_call.1} parent=1 // pred_fallthru
      _
    // Predicated region
    $region26: #{tpu_custom_call.1} parent=1 // pred_check
      _
    $region27: #{tpu_custom_call.1} parent=1 // pred_check_branch
      %1961 = sbr.rel (0) target = $region29
    $region28: #{tpu_custom_call.1} parent=1 // pred_region
      %1963 = vsyncadd [#allocation3], 0
      %s1964 = sshll.u32 [#allocation2], 4
      %s1965 = int_to_ptr.vmem [resolvable:$true] %s1964
      %s1966 = sshll.u32 %s6, 4
      %s1967 = int_to_ptr.hbm [resolvable:$true] %s1966
      %1972 = dma.vmem_to_hbm [thread:$0]  %s1965, 4096, %s1967, [#allocation3], 128, 128, 8
    $region29: #{tpu_custom_call.1} parent=1 // pred_fallthru
      _
    // Predicated region
    $region30: #{tpu_custom_call.1} parent=1 // pred_check
      _
    $region31: #{tpu_custom_call.1} parent=1 // pred_check_branch
      %1974 = sbr.rel (0) target = $region33
    $region32: #{tpu_custom_call.1} parent=1 // pred_region
      _
    $region33: #{tpu_custom_call.1} parent=1 // pred_fallthru
      _
    // Predicated region
    $region34: #{tpu_custom_call.1} parent=1 // pred_check
      _
    $region35: #{tpu_custom_call.1} parent=1 // pred_check_branch
      %1976 = sbr.rel (0) target = $region37
    $region36: #{tpu_custom_call.1} parent=1 // pred_region
      %1978 = dma.done [#allocation3], 4096
    $region37: #{tpu_custom_call.1} parent=1 // pred_fallthru
      _
    %1979 = vsyncpa [#allocation3], 1

</llo_original>
